<compile_context>
chip_gen: v7x
topology: tpu7x:2x2x1
jax: 0.10.0
libtpu: 0.0.40
codegen_flags: <defaults>
</compile_context>

<pallas_src>
import functools

import jax
import jax.numpy as jnp
from jax.experimental import pallas as pl
from jax.experimental.pallas import tpu as pltpu


def _round_up(n, m):
    return ((n + m - 1) // m) * m


def _cdiv(a, b):
    return -(-a // b)


def _vmem_capacity_bytes():
    """Physical VMEM per TensorCore; conservative (v7x) fallback if the query fails."""
    try:
        info = pltpu.get_tpu_info()
        cap = int(getattr(info, "vmem_capacity_bytes", 0) or 0)
        if cap > 0:
            return cap
    except Exception:
        pass
    return 64 * 1024 * 1024  # v7x per-TC VMEM — safe lower bound on every part


def _choose_tiling(batch, input_dim, hidden_dim, x_itemsize):
    """Pick (tile_b, padded_b, num_tiles, lane_dense_ok) from the VMEM budget.

    All buffers are accounted for with their (8,128) lane/sublane padding so
    the tile is legal on v7x's 64 MiB as well as v5e/v6e's 128 MiB.
    """
    capacity = _vmem_capacity_bytes()
    budget = int(capacity * 0.70)          # headroom for compiler scratch / pipeline

    pin = _round_up(input_dim, 128)        # lane-padded widths actually resident
    phd = _round_up(hidden_dim, 128)
    # Weights budgeted at 2 buffers (worst case if Buffered(1) falls back);
    # the bias / w2 rows pad to 8 sublanes.
    weight_bytes = 2 * (pin * phd * x_itemsize + 2 * 8 * phd * 4)
    per_row = (2 * pin * x_itemsize        # x tile, double-buffered
               + 3 * phd * 4               # h + elementwise temporaries (f32)
               + 2 * 128 * 4)              # output block (lane-padded worst case), x2
    avail = max(budget - weight_bytes, 1 << 20)
    tile_cap = max(128, avail // per_row)

    pb = _round_up(batch, 128)
    if pb <= tile_cap and pb < 2048:
        # Small batch: a single tile covers it (nothing meaningful to shard
        # across TensorCores; per-step overhead fully amortized).
        return pb, pb, 1, True

    unit = 1024                            # multi-tile granule: keeps the lane-dense
                                           # out block (tile_b//128, 128) (8,128)-aligned
    if tile_cap < unit:
        # Very large feature dims / tiny budget: 128-row granule, column output.
        tile_b = max(128, (tile_cap // 128) * 128)
        num_tiles = _cdiv(pb, tile_b)
        return tile_b, num_tiles * tile_b, num_tiles, (num_tiles == 1)

    padded_b = _round_up(batch, unit)
    n_units = padded_b // unit
    cap_units = tile_cap // unit
    # Keep >=2 tiles when the batch is big enough so the "parallel" batch axis
    # has work to shard across both TensorCores on megacore (v7x) parts.
    min_tiles = max(2 if n_units >= 2 else 1, _cdiv(n_units, cap_units))
    num_tiles = next(t for t in range(min_tiles, n_units + 1) if n_units % t == 0)
    tile_b = padded_b // num_tiles
    return tile_b, padded_b, num_tiles, True


def _value_net_kernel(x_ref, w1_ref, b1_ref, w2_ref, b2_ref, o_ref, *, lane_dense):
    # Layer 1: (tile_b, in) @ (in, hidden) on the MXU, f32 accumulation.
    h = jnp.dot(x_ref[...], w1_ref[...], preferred_element_type=jnp.float32)
    h = jnp.maximum(h + b1_ref[...], 0.0)                    # bias + ReLU on the VPU

    # Layer 2: hidden -> 1 as VPU multiply + XLU lane reduction (no N=1 matmul).
    if lane_dense:
        g, lanes = o_ref.shape                               # (tile_b // 128, 128)
        hr = h.reshape(g, lanes, h.shape[-1])                # split sublane dim only
        v = jnp.sum(hr * w2_ref[...], axis=-1) + b2_ref[0, 0]
        o_ref[...] = v.astype(o_ref.dtype)                   # unmasked lane-dense store
    else:
        v = jnp.sum(h * w2_ref[...], axis=-1, keepdims=True) + b2_ref[0, 0]
        o_ref[...] = v.astype(o_ref.dtype)                   # (tile_b, 1) column store


def _build_call(tile_b, padded_b, num_tiles, input_dim, hidden_dim,
                lane_dense, single_buffer_weights, vmem_limit, cost):
    w_pipe = dict(pipeline_mode=pl.Buffered(1)) if single_buffer_weights else {}
    in_specs = [
        # x: batch-tiled -> DMA of tile i+1 overlaps compute of tile i.
        pl.BlockSpec((tile_b, input_dim), lambda i: (i, 0)),
        # Weights / biases: constant block index -> resident across grid steps.
        pl.BlockSpec((input_dim, hidden_dim), lambda i: (0, 0), **w_pipe),
        pl.BlockSpec((1, hidden_dim), lambda i: (0, 0), **w_pipe),
        pl.BlockSpec((1, hidden_dim), lambda i: (0, 0), **w_pipe),
        # b2: scalar parameter living in SMEM.
        pl.BlockSpec(memory_space=pltpu.MemorySpace.SMEM),
    ]
    if lane_dense:
        out_shape = jax.ShapeDtypeStruct((padded_b // 128, 128), jnp.float32)
        out_spec = pl.BlockSpec((tile_b // 128, 128), lambda i: (i, 0))
    else:
        out_shape = jax.ShapeDtypeStruct((padded_b, 1), jnp.float32)
        out_spec = pl.BlockSpec((tile_b, 1), lambda i: (i, 0))

    return pl.pallas_call(
        functools.partial(_value_net_kernel, lane_dense=lane_dense),
        out_shape=out_shape,
        grid_spec=pltpu.PrefetchScalarGridSpec(
            num_scalar_prefetch=0,
            grid=(num_tiles,),
            in_specs=in_specs,
            out_specs=out_spec,
        ),
        compiler_params=pltpu.CompilerParams(
            dimension_semantics=("parallel",),   # independent batch tiles; shards
                                                 # across both TCs on v7x megacore
            vmem_limit_bytes=vmem_limit,
        ),
        cost_estimate=cost,
    )


_CONFIG_CACHE = {}


def value_network_forward(x, w1, b1, w2, b2, *, use_bf16_inputs=True):
    """ValueNetwork forward: ReLU(x @ w1 + b1) @ w2 + b2 -> (B, 1) float32.

    use_bf16_inputs (default True) ships x / w1 as bf16: halves the dominant
    HBM traffic; accumulation, bias+ReLU and layer 2 stay f32.  Set False for
    bit-tight f32 numerics vs the PyTorch reference.
    """
    batch, input_dim = x.shape
    hidden_dim = w1.shape[1]

    if use_bf16_inputs:
        x = x.astype(jnp.bfloat16)
        w1 = w1.astype(jnp.bfloat16)
    else:
        x = x.astype(jnp.float32)
        w1 = w1.astype(jnp.float32)
    itemsize = jnp.dtype(x.dtype).itemsize

    tile_b, padded_b, num_tiles, lane_dense_ok = _choose_tiling(
        batch, input_dim, hidden_dim, itemsize)

    if padded_b != batch:
        x = jnp.pad(x, ((0, padded_b - batch), (0, 0)))

    b1_row = b1.reshape(1, hidden_dim).astype(jnp.float32)
    w2_row = w2.reshape(1, hidden_dim).astype(jnp.float32)   # (hidden, 1) -> row
    b2_s = jnp.asarray(b2, jnp.float32).reshape(1, 1)        # scalar -> SMEM

    vmem_limit = int(_vmem_capacity_bytes() * 0.80)
    cost = pl.CostEstimate(
        flops=2 * padded_b * input_dim * hidden_dim + 4 * padded_b * hidden_dim,
        transcendentals=0,
        bytes_accessed=(padded_b * input_dim * itemsize
                        + input_dim * hidden_dim * itemsize
                        + 2 * hidden_dim * 4 + 4 + padded_b * 4),
    )

    key = (batch, input_dim, hidden_dim, str(x.dtype), tile_b, padded_b)
    if key in _CONFIG_CACHE:
        configs = [_CONFIG_CACHE[key]]
    else:
        configs = []
        for ld in ([True, False] if lane_dense_ok else [False]):
            for sb in (True, False):
                configs.append((ld, sb))

    last_err = None
    for ld, sb in configs:
        try:
            call = _build_call(tile_b, padded_b, num_tiles, input_dim, hidden_dim,
                               ld, sb, vmem_limit, cost)
            out = call(x, w1, b1_row, w2_row, b2_s)
            if ld:
                out = out.reshape(padded_b, 1)
            out = out[:batch]
            if key not in _CONFIG_CACHE:
                out = jax.block_until_ready(out)   # surface any lowering/runtime
                _CONFIG_CACHE[key] = (ld, sb)      # error before committing config
            return out
        except Exception as err:                   # fall back to a simpler lowering
            last_err = err
    raise last_err


def init_value_network_params(key, input_dim, hidden_dim):
    """Mirrors torch.nn.Linear's U(-1/sqrt(fan_in), 1/sqrt(fan_in)) init.
    Weights are stored pre-transposed: (in_features, out_features)."""
    k1, k2, k3, k4 = jax.random.split(key, 4)
    bound1 = 1.0 / jnp.sqrt(jnp.float32(input_dim))
    bound2 = 1.0 / jnp.sqrt(jnp.float32(hidden_dim))
    w1 = jax.random.uniform(k1, (input_dim, hidden_dim), jnp.float32, -bound1, bound1)
    b1 = jax.random.uniform(k2, (1, hidden_dim), jnp.float32, -bound1, bound1)
    w2 = jax.random.uniform(k3, (hidden_dim, 1), jnp.float32, -bound2, bound2)
    b2 = jax.random.uniform(k4, (1, 1), jnp.float32, -bound2, bound2)
    return w1, b1, w2, b2


if __name__ == "__main__":
    input_dim, hidden_dim = 16, 32
    key = jax.random.PRNGKey(0)
    k_params, k_x1, k_x2 = jax.random.split(key, 3)
    w1, b1, w2, b2 = init_value_network_params(k_params, input_dim, hidden_dim)

    def torch_ref(xs):
        return jnp.maximum(xs @ w1 + b1, 0.0) @ w2 + b2

    # (a) Small batch, f32 path: bit-tight vs the PyTorch-equivalent reference.
    x_small = jax.random.normal(k_x1, (200, input_dim), jnp.float32)
    out = value_network_forward(x_small, w1, b1, w2, b2, use_bf16_inputs=False)
    out = jax.block_until_ready(out)
    assert out.shape == (200, 1), out.shape
    assert jnp.allclose(out, torch_ref(x_small), atol=1e-4, rtol=1e-4), "f32 mismatch"

    # (b) Multi-tile path: exercises lane-dense output row mapping across grid steps.
    x_big = jax.random.normal(k_x2, (2304, input_dim), jnp.float32)
    out_big = value_network_forward(x_big, w1, b1, w2, b2, use_bf16_inputs=False)
    out_big = jax.block_until_ready(out_big)
    assert out_big.shape == (2304, 1), out_big.shape
    assert jnp.allclose(out_big, torch_ref(x_big), atol=1e-4, rtol=1e-4), "multi-tile mismatch"

    # (c) Default bf16-shipping path: looser tolerance (x / w1 truncated to bf16).
    out_bf = value_network_forward(x_small, w1, b1, w2, b2)
    out_bf = jax.block_until_ready(out_bf)
    assert out_bf.shape == (200, 1), out_bf.shape
    assert jnp.allclose(out_bf, torch_ref(x_small), atol=5e-2, rtol=5e-2), "bf16 mismatch"

    print("KERNEL_OK")
</pallas_src>

<mosaic_0001>
module attributes {stable_mosaic.version = 11 : i64} {
  func.func @_value_net_kernel(%arg0: i32, %arg1: memref<256x16xf32, #tpu.memory_space<vmem>>, %arg2: memref<16x32xf32, #tpu.memory_space<vmem>>, %arg3: memref<1x32xf32, #tpu.memory_space<vmem>>, %arg4: memref<1x32xf32, #tpu.memory_space<vmem>>, %arg5: memref<1x1xf32, #tpu.memory_space<smem>>, %arg6: memref<2x128xf32, #tpu.memory_space<vmem>>) attributes {dimension_semantics = [#tpu.dimension_semantics<parallel>], iteration_bounds = array<i64: 1>, scalar_prefetch = 0 : i64, scratch_operands = 0 : i64, tpu.core_type = #tpu.core_type<tc>, window_params = [{transform_indices = @transform_0, window_bounds = array<i64: 256, 16>}, {pipeline_mode = #tpu.pipeline_mode<synchronous>, transform_indices = @transform_1, window_bounds = array<i64: 16, 32>}, {pipeline_mode = #tpu.pipeline_mode<synchronous>, transform_indices = @transform_2, window_bounds = array<i64: 1, 32>}, {pipeline_mode = #tpu.pipeline_mode<synchronous>, transform_indices = @transform_3, window_bounds = array<i64: 1, 32>}, {transform_indices = @transform_4, window_bounds = array<i64: 1, 1>}, {transform_indices = @transform_5, window_bounds = array<i64: 2, 128>}]} {
    %c0 = arith.constant 0 : index
    %c0_0 = arith.constant 0 : index
    %0 = vector.load %arg1[%c0, %c0_0] : memref<256x16xf32, #tpu.memory_space<vmem>>, vector<256x16xf32>
    %c0_1 = arith.constant 0 : index
    %c0_2 = arith.constant 0 : index
    %1 = vector.load %arg2[%c0_1, %c0_2] : memref<16x32xf32, #tpu.memory_space<vmem>>, vector<16x32xf32>
    %cst = arith.constant dense<0.000000e+00> : vector<256x32xf32>
    %2 = tpu.matmul %0, %1, %cst {dimension_numbers = #tpu.dot_dimension_numbers<[1], [0], [0], [1], [0, 0, 1, 1], [], []>} : vector<256x16xf32>, vector<16x32xf32>, vector<256x32xf32> -> vector<256x32xf32>
    %c0_3 = arith.constant 0 : index
    %c0_4 = arith.constant 0 : index
    %3 = vector.load %arg3[%c0_3, %c0_4] : memref<1x32xf32, #tpu.memory_space<vmem>>, vector<1x32xf32>
    %4 = vector.broadcast %3 : vector<1x32xf32> to vector<256x32xf32>
    %5 = arith.addf %2, %4 : vector<256x32xf32>
    %cst_5 = arith.constant 0.000000e+00 : f32
    %6 = vector.broadcast %cst_5 : f32 to vector<256x32xf32>
    %7 = arith.maximumf %5, %6 : vector<256x32xf32>
    %8 = vector.shape_cast %7 : vector<256x32xf32> to vector<2x128x32xf32>
    %c0_6 = arith.constant 0 : index
    %c0_7 = arith.constant 0 : index
    %9 = vector.load %arg4[%c0_6, %c0_7] : memref<1x32xf32, #tpu.memory_space<vmem>>, vector<1x32xf32>
    %10 = vector.shape_cast %9 : vector<1x32xf32> to vector<1x1x32xf32>
    %11 = vector.broadcast %10 : vector<1x1x32xf32> to vector<2x128x32xf32>
    %12 = arith.mulf %8, %11 : vector<2x128x32xf32>
    %cst_8 = arith.constant dense<0.000000e+00> : vector<2x128xf32>
    %13 = vector.multi_reduction <add>, %12, %cst_8 [2] : vector<2x128x32xf32> to vector<2x128xf32>
    %c0_9 = arith.constant 0 : index
    %c0_10 = arith.constant 0 : index
    %14 = memref.load %arg5[%c0_9, %c0_10] : memref<1x1xf32, #tpu.memory_space<smem>>
    %15 = vector.broadcast %14 : f32 to vector<2x128xf32>
    %16 = arith.addf %13, %15 : vector<2x128xf32>
    %c0_11 = arith.constant 0 : index
    %c0_12 = arith.constant 0 : index
    %17 = vector.load %arg6[%c0_11, %c0_12] : memref<2x128xf32, #tpu.memory_space<vmem>>, vector<2x128xf32>
    tpu.vector_store %arg6[%c0_11, %c0_12], %16 {strides = array<i32>} : memref<2x128xf32, #tpu.memory_space<vmem>>, vector<2x128xf32>,
    return
  }
  func.func @transform_0(%arg0: i32) -> (i32, i32) {
    %c0_i32 = arith.constant 0 : i32
    %c0_i32_0 = arith.constant 0 : i32
    return %arg0, %c0_i32 : i32, i32
  }
  func.func @transform_1(%arg0: i32) -> (i32, i32) {
    %c0_i32 = arith.constant 0 : i32
    %c0_i32_0 = arith.constant 0 : i32
    %c0_i32_1 = arith.constant 0 : i32
    return %c0_i32, %c0_i32_0 : i32, i32
  }
  func.func @transform_2(%arg0: i32) -> (i32, i32) {
    %c0_i32 = arith.constant 0 : i32
    %c0_i32_0 = arith.constant 0 : i32
    %c0_i32_1 = arith.constant 0 : i32
    return %c0_i32, %c0_i32_0 : i32, i32
  }
  func.func @transform_3(%arg0: i32) -> (i32, i32) {
    %c0_i32 = arith.constant 0 : i32
    %c0_i32_0 = arith.constant 0 : i32
    %c0_i32_1 = arith.constant 0 : i32
    return %c0_i32, %c0_i32_0 : i32, i32
  }
  func.func @transform_4(%arg0: i32) -> (i32, i32) {
    %c0_i32 = arith.constant 0 : i32
    %c0_i32_0 = arith.constant 0 : i32
    %c0_i32_1 = arith.constant 0 : i32
    return %c0_i32, %c0_i32_0 : i32, i32
  }
  func.func @transform_5(%arg0: i32) -> (i32, i32) {
    %c0_i32 = arith.constant 0 : i32
    %c0_i32_0 = arith.constant 0 : i32
    return %arg0, %c0_i32 : i32, i32
  }
}

module attributes {stable_mosaic.version = 11 : i64} {
  func.func @_value_net_kernel(%arg0: i32, %arg1: memref<256x16xf32, #tpu.memory_space<vmem>>, %arg2: memref<16x32xf32, #tpu.memory_space<vmem>>, %arg3: memref<1x32xf32, #tpu.memory_space<vmem>>, %arg4: memref<1x32xf32, #tpu.memory_space<vmem>>, %arg5: memref<1x1xf32, #tpu.memory_space<smem>>, %arg6: memref<2x128xf32, #tpu.memory_space<vmem>>) attributes {dimension_semantics = [#tpu.dimension_semantics<parallel>], iteration_bounds = array<i64: 1>, scalar_prefetch = 0 : i64, scratch_operands = 0 : i64, tpu.core_type = #tpu.core_type<tc>, window_params = [{transform_indices = @transform_0, window_bounds = array<i64: 256, 16>}, {pipeline_mode = #tpu.pipeline_mode<synchronous>, transform_indices = @transform_1, window_bounds = array<i64: 16, 32>}, {pipeline_mode = #tpu.pipeline_mode<synchronous>, transform_indices = @transform_2, window_bounds = array<i64: 1, 32>}, {pipeline_mode = #tpu.pipeline_mode<synchronous>, transform_indices = @transform_3, window_bounds = array<i64: 1, 32>}, {transform_indices = @transform_4, window_bounds = array<i64: 1, 1>}, {transform_indices = @transform_5, window_bounds = array<i64: 2, 128>}]} {
    %c0 = arith.constant 0 : index
    %c0_0 = arith.constant 0 : index
    %0 = vector.load %arg1[%c0, %c0_0] : memref<256x16xf32, #tpu.memory_space<vmem>>, vector<256x16xf32>
    %c0_1 = arith.constant 0 : index
    %c0_2 = arith.constant 0 : index
    %1 = vector.load %arg2[%c0_1, %c0_2] : memref<16x32xf32, #tpu.memory_space<vmem>>, vector<16x32xf32>
    %cst = arith.constant dense<0.000000e+00> : vector<256x32xf32>
    %2 = tpu.matmul %0, %1, %cst {dimension_numbers = #tpu.dot_dimension_numbers<[1], [0], [0], [1], [0, 0, 1, 1], [], []>} : vector<256x16xf32>, vector<16x32xf32>, vector<256x32xf32> -> vector<256x32xf32>
    %c0_3 = arith.constant 0 : index
    %c0_4 = arith.constant 0 : index
    %3 = vector.load %arg3[%c0_3, %c0_4] : memref<1x32xf32, #tpu.memory_space<vmem>>, vector<1x32xf32>
    %4 = vector.broadcast %3 : vector<1x32xf32> to vector<256x32xf32>
    %5 = arith.addf %2, %4 : vector<256x32xf32>
    %cst_5 = arith.constant 0.000000e+00 : f32
    %6 = vector.broadcast %cst_5 : f32 to vector<256x32xf32>
    %7 = arith.maximumf %5, %6 : vector<256x32xf32>
    %8 = vector.shape_cast %7 : vector<256x32xf32> to vector<2x128x32xf32>
    %c0_6 = arith.constant 0 : index
    %c0_7 = arith.constant 0 : index
    %9 = vector.load %arg4[%c0_6, %c0_7] : memref<1x32xf32, #tpu.memory_space<vmem>>, vector<1x32xf32>
    %10 = vector.shape_cast %9 : vector<1x32xf32> to vector<1x1x32xf32>
    %11 = vector.broadcast %10 : vector<1x1x32xf32> to vector<2x128x32xf32>
    %12 = arith.mulf %8, %11 : vector<2x128x32xf32>
    %cst_8 = arith.constant dense<0.000000e+00> : vector<2x128xf32>
    %13 = vector.multi_reduction <add>, %12, %cst_8 [2] : vector<2x128x32xf32> to vector<2x128xf32>
    %c0_9 = arith.constant 0 : index
    %c0_10 = arith.constant 0 : index
    %14 = memref.load %arg5[%c0_9, %c0_10] : memref<1x1xf32, #tpu.memory_space<smem>>
    %15 = vector.broadcast %14 : f32 to vector<2x128xf32>
    %16 = arith.addf %13, %15 : vector<2x128xf32>
    %c0_11 = arith.constant 0 : index
    %c0_12 = arith.constant 0 : index
    %17 = vector.load %arg6[%c0_11, %c0_12] : memref<2x128xf32, #tpu.memory_space<vmem>>, vector<2x128xf32>
    tpu.vector_store %arg6[%c0_11, %c0_12], %16 {strides = array<i32>} : memref<2x128xf32, #tpu.memory_space<vmem>>, vector<2x128xf32>,
    return
  }
  func.func @transform_0(%arg0: i32) -> (i32, i32) {
    %c0_i32 = arith.constant 0 : i32
    %c0_i32_0 = arith.constant 0 : i32
    return %arg0, %c0_i32 : i32, i32
  }
  func.func @transform_1(%arg0: i32) -> (i32, i32) {
    %c0_i32 = arith.constant 0 : i32
    %c0_i32_0 = arith.constant 0 : i32
    %c0_i32_1 = arith.constant 0 : i32
    return %c0_i32, %c0_i32_0 : i32, i32
  }
  func.func @transform_2(%arg0: i32) -> (i32, i32) {
    %c0_i32 = arith.constant 0 : i32
    %c0_i32_0 = arith.constant 0 : i32
    %c0_i32_1 = arith.constant 0 : i32
    return %c0_i32, %c0_i32_0 : i32, i32
  }
  func.func @transform_3(%arg0: i32) -> (i32, i32) {
    %c0_i32 = arith.constant 0 : i32
    %c0_i32_0 = arith.constant 0 : i32
    %c0_i32_1 = arith.constant 0 : i32
    return %c0_i32, %c0_i32_0 : i32, i32
  }
  func.func @transform_4(%arg0: i32) -> (i32, i32) {
    %c0_i32 = arith.constant 0 : i32
    %c0_i32_0 = arith.constant 0 : i32
    %c0_i32_1 = arith.constant 0 : i32
    return %c0_i32, %c0_i32_0 : i32, i32
  }
  func.func @transform_5(%arg0: i32) -> (i32, i32) {
    %c0_i32 = arith.constant 0 : i32
    %c0_i32_0 = arith.constant 0 : i32
    return %arg0, %c0_i32 : i32, i32
  }
}

module attributes {stable_mosaic.version = 11 : i64} {
  func.func @_value_net_kernel(%arg0: i32, %arg1: memref<256x16xf32, #tpu.memory_space<vmem>>, %arg2: memref<16x32xf32, #tpu.memory_space<vmem>>, %arg3: memref<1x32xf32, #tpu.memory_space<vmem>>, %arg4: memref<1x32xf32, #tpu.memory_space<vmem>>, %arg5: memref<1x1xf32, #tpu.memory_space<smem>>, %arg6: memref<256x1xf32, #tpu.memory_space<vmem>>) attributes {dimension_semantics = [#tpu.dimension_semantics<parallel>], iteration_bounds = array<i64: 1>, scalar_prefetch = 0 : i64, scratch_operands = 0 : i64, tpu.core_type = #tpu.core_type<tc>, window_params = [{transform_indices = @transform_0, window_bounds = array<i64: 256, 16>}, {pipeline_mode = #tpu.pipeline_mode<synchronous>, transform_indices = @transform_1, window_bounds = array<i64: 16, 32>}, {pipeline_mode = #tpu.pipeline_mode<synchronous>, transform_indices = @transform_2, window_bounds = array<i64: 1, 32>}, {pipeline_mode = #tpu.pipeline_mode<synchronous>, transform_indices = @transform_3, window_bounds = array<i64: 1, 32>}, {transform_indices = @transform_4, window_bounds = array<i64: 1, 1>}, {transform_indices = @transform_5, window_bounds = array<i64: 256, 1>}]} {
    %c0 = arith.constant 0 : index
    %c0_0 = arith.constant 0 : index
    %0 = vector.load %arg1[%c0, %c0_0] : memref<256x16xf32, #tpu.memory_space<vmem>>, vector<256x16xf32>
    %c0_1 = arith.constant 0 : index
    %c0_2 = arith.constant 0 : index
    %1 = vector.load %arg2[%c0_1, %c0_2] : memref<16x32xf32, #tpu.memory_space<vmem>>, vector<16x32xf32>
    %cst = arith.constant dense<0.000000e+00> : vector<256x32xf32>
    %2 = tpu.matmul %0, %1, %cst {dimension_numbers = #tpu.dot_dimension_numbers<[1], [0], [0], [1], [0, 0, 1, 1], [], []>} : vector<256x16xf32>, vector<16x32xf32>, vector<256x32xf32> -> vector<256x32xf32>
    %c0_3 = arith.constant 0 : index
    %c0_4 = arith.constant 0 : index
    %3 = vector.load %arg3[%c0_3, %c0_4] : memref<1x32xf32, #tpu.memory_space<vmem>>, vector<1x32xf32>
    %4 = vector.broadcast %3 : vector<1x32xf32> to vector<256x32xf32>
    %5 = arith.addf %2, %4 : vector<256x32xf32>
    %cst_5 = arith.constant 0.000000e+00 : f32
    %6 = vector.broadcast %cst_5 : f32 to vector<256x32xf32>
    %7 = arith.maximumf %5, %6 : vector<256x32xf32>
    %c0_6 = arith.constant 0 : index
    %c0_7 = arith.constant 0 : index
    %8 = vector.load %arg4[%c0_6, %c0_7] : memref<1x32xf32, #tpu.memory_space<vmem>>, vector<1x32xf32>
    %9 = vector.broadcast %8 : vector<1x32xf32> to vector<256x32xf32>
    %10 = arith.mulf %7, %9 : vector<256x32xf32>
    %cst_8 = arith.constant dense<0.000000e+00> : vector<256xf32>
    %11 = vector.multi_reduction <add>, %10, %cst_8 [1] : vector<256x32xf32> to vector<256xf32>
    %12 = vector.shape_cast %11 : vector<256xf32> to vector<256x1xf32>
    %c0_9 = arith.constant 0 : index
    %c0_10 = arith.constant 0 : index
    %13 = memref.load %arg5[%c0_9, %c0_10] : memref<1x1xf32, #tpu.memory_space<smem>>
    %14 = vector.broadcast %13 : f32 to vector<256x1xf32>
    %15 = arith.addf %12, %14 : vector<256x1xf32>
    %c0_11 = arith.constant 0 : index
    %c0_12 = arith.constant 0 : index
    %16 = vector.load %arg6[%c0_11, %c0_12] : memref<256x1xf32, #tpu.memory_space<vmem>>, vector<256x1xf32>
    tpu.vector_store %arg6[%c0_11, %c0_12], %15 {strides = array<i32>} : memref<256x1xf32, #tpu.memory_space<vmem>>, vector<256x1xf32>,
    return
  }
  func.func @transform_0(%arg0: i32) -> (i32, i32) {
    %c0_i32 = arith.constant 0 : i32
    %c0_i32_0 = arith.constant 0 : i32
    return %arg0, %c0_i32 : i32, i32
  }
  func.func @transform_1(%arg0: i32) -> (i32, i32) {
    %c0_i32 = arith.constant 0 : i32
    %c0_i32_0 = arith.constant 0 : i32
    %c0_i32_1 = arith.constant 0 : i32
    return %c0_i32, %c0_i32_0 : i32, i32
  }
  func.func @transform_2(%arg0: i32) -> (i32, i32) {
    %c0_i32 = arith.constant 0 : i32
    %c0_i32_0 = arith.constant 0 : i32
    %c0_i32_1 = arith.constant 0 : i32
    return %c0_i32, %c0_i32_0 : i32, i32
  }
  func.func @transform_3(%arg0: i32) -> (i32, i32) {
    %c0_i32 = arith.constant 0 : i32
    %c0_i32_0 = arith.constant 0 : i32
    %c0_i32_1 = arith.constant 0 : i32
    return %c0_i32, %c0_i32_0 : i32, i32
  }
  func.func @transform_4(%arg0: i32) -> (i32, i32) {
    %c0_i32 = arith.constant 0 : i32
    %c0_i32_0 = arith.constant 0 : i32
    %c0_i32_1 = arith.constant 0 : i32
    return %c0_i32, %c0_i32_0 : i32, i32
  }
  func.func @transform_5(%arg0: i32) -> (i32, i32) {
    %c0_i32 = arith.constant 0 : i32
    %c0_i32_0 = arith.constant 0 : i32
    return %arg0, %c0_i32 : i32, i32
  }
}

module attributes {stable_mosaic.version = 11 : i64} {
  func.func @_value_net_kernel(%arg0: i32, %arg1: memref<256x16xf32, #tpu.memory_space<vmem>>, %arg2: memref<16x32xf32, #tpu.memory_space<vmem>>, %arg3: memref<1x32xf32, #tpu.memory_space<vmem>>, %arg4: memref<1x32xf32, #tpu.memory_space<vmem>>, %arg5: memref<1x1xf32, #tpu.memory_space<smem>>, %arg6: memref<256x1xf32, #tpu.memory_space<vmem>>) attributes {dimension_semantics = [#tpu.dimension_semantics<parallel>], iteration_bounds = array<i64: 1>, scalar_prefetch = 0 : i64, scratch_operands = 0 : i64, tpu.core_type = #tpu.core_type<tc>, window_params = [{transform_indices = @transform_0, window_bounds = array<i64: 256, 16>}, {pipeline_mode = #tpu.pipeline_mode<synchronous>, transform_indices = @transform_1, window_bounds = array<i64: 16, 32>}, {pipeline_mode = #tpu.pipeline_mode<synchronous>, transform_indices = @transform_2, window_bounds = array<i64: 1, 32>}, {pipeline_mode = #tpu.pipeline_mode<synchronous>, transform_indices = @transform_3, window_bounds = array<i64: 1, 32>}, {transform_indices = @transform_4, window_bounds = array<i64: 1, 1>}, {transform_indices = @transform_5, window_bounds = array<i64: 256, 1>}]} {
    %c0 = arith.constant 0 : index
    %c0_0 = arith.constant 0 : index
    %0 = vector.load %arg1[%c0, %c0_0] : memref<256x16xf32, #tpu.memory_space<vmem>>, vector<256x16xf32>
    %c0_1 = arith.constant 0 : index
    %c0_2 = arith.constant 0 : index
    %1 = vector.load %arg2[%c0_1, %c0_2] : memref<16x32xf32, #tpu.memory_space<vmem>>, vector<16x32xf32>
    %cst = arith.constant dense<0.000000e+00> : vector<256x32xf32>
    %2 = tpu.matmul %0, %1, %cst {dimension_numbers = #tpu.dot_dimension_numbers<[1], [0], [0], [1], [0, 0, 1, 1], [], []>} : vector<256x16xf32>, vector<16x32xf32>, vector<256x32xf32> -> vector<256x32xf32>
    %c0_3 = arith.constant 0 : index
    %c0_4 = arith.constant 0 : index
    %3 = vector.load %arg3[%c0_3, %c0_4] : memref<1x32xf32, #tpu.memory_space<vmem>>, vector<1x32xf32>
    %4 = vector.broadcast %3 : vector<1x32xf32> to vector<256x32xf32>
    %5 = arith.addf %2, %4 : vector<256x32xf32>
    %cst_5 = arith.constant 0.000000e+00 : f32
    %6 = vector.broadcast %cst_5 : f32 to vector<256x32xf32>
    %7 = arith.maximumf %5, %6 : vector<256x32xf32>
    %c0_6 = arith.constant 0 : index
    %c0_7 = arith.constant 0 : index
    %8 = vector.load %arg4[%c0_6, %c0_7] : memref<1x32xf32, #tpu.memory_space<vmem>>, vector<1x32xf32>
    %9 = vector.broadcast %8 : vector<1x32xf32> to vector<256x32xf32>
    %10 = arith.mulf %7, %9 : vector<256x32xf32>
    %cst_8 = arith.constant dense<0.000000e+00> : vector<256xf32>
    %11 = vector.multi_reduction <add>, %10, %cst_8 [1] : vector<256x32xf32> to vector<256xf32>
    %12 = vector.shape_cast %11 : vector<256xf32> to vector<256x1xf32>
    %c0_9 = arith.constant 0 : index
    %c0_10 = arith.constant 0 : index
    %13 = memref.load %arg5[%c0_9, %c0_10] : memref<1x1xf32, #tpu.memory_space<smem>>
    %14 = vector.broadcast %13 : f32 to vector<256x1xf32>
    %15 = arith.addf %12, %14 : vector<256x1xf32>
    %c0_11 = arith.constant 0 : index
    %c0_12 = arith.constant 0 : index
    %16 = vector.load %arg6[%c0_11, %c0_12] : memref<256x1xf32, #tpu.memory_space<vmem>>, vector<256x1xf32>
    tpu.vector_store %arg6[%c0_11, %c0_12], %15 {strides = array<i32>} : memref<256x1xf32, #tpu.memory_space<vmem>>, vector<256x1xf32>,
    return
  }
  func.func @transform_0(%arg0: i32) -> (i32, i32) {
    %c0_i32 = arith.constant 0 : i32
    %c0_i32_0 = arith.constant 0 : i32
    return %arg0, %c0_i32 : i32, i32
  }
  func.func @transform_1(%arg0: i32) -> (i32, i32) {
    %c0_i32 = arith.constant 0 : i32
    %c0_i32_0 = arith.constant 0 : i32
    %c0_i32_1 = arith.constant 0 : i32
    return %c0_i32, %c0_i32_0 : i32, i32
  }
  func.func @transform_2(%arg0: i32) -> (i32, i32) {
    %c0_i32 = arith.constant 0 : i32
    %c0_i32_0 = arith.constant 0 : i32
    %c0_i32_1 = arith.constant 0 : i32
    return %c0_i32, %c0_i32_0 : i32, i32
  }
  func.func @transform_3(%arg0: i32) -> (i32, i32) {
    %c0_i32 = arith.constant 0 : i32
    %c0_i32_0 = arith.constant 0 : i32
    %c0_i32_1 = arith.constant 0 : i32
    return %c0_i32, %c0_i32_0 : i32, i32
  }
  func.func @transform_4(%arg0: i32) -> (i32, i32) {
    %c0_i32 = arith.constant 0 : i32
    %c0_i32_0 = arith.constant 0 : i32
    %c0_i32_1 = arith.constant 0 : i32
    return %c0_i32, %c0_i32_0 : i32, i32
  }
  func.func @transform_5(%arg0: i32) -> (i32, i32) {
    %c0_i32 = arith.constant 0 : i32
    %c0_i32_0 = arith.constant 0 : i32
    return %arg0, %c0_i32 : i32, i32
  }
}

</mosaic_0001>

<llo_original>
// kernel: tpu_custom_call.1
$region0: #{tpu_custom_call.1}
  #allocation0 [shape = 'u32[]', space=smem, size = 0x4, offset = 0x4, fixed_abs, tag = 'smem constant byte address 0x4 - core index']
  #allocation1 [shape = 'u32[144,128]{1,0:T(1,128)}', space=vmem, size = 0x12000, scoped, tag = 'internal scratch']
  #allocation2 [shape = 'f32[1,1]{1,0:T(1,128)S(6)}', space=smem, size = 0x200, scoped, tag = 'scoped memory for tpu_custom_call.1']
  %s0 = inlined_call_operand.vmem [shape: f32[256,16], index: 0, kind: input, shape index: {}]
  %s1 = inlined_call_operand.vmem [shape: f32[16,32], index: 1, kind: input, shape index: {}]
  %s2 = inlined_call_operand.vmem [shape: f32[1,32], index: 2, kind: input, shape index: {}]
  %s3 = inlined_call_operand.vmem [shape: f32[1,32], index: 3, kind: input, shape index: {}]
  %s4 = inlined_call_operand.<no memory space> [shape: f32[1,1], index: 4, kind: input, shape index: {}]
  %s5 = inlined_call_operand.hbm [shape: f32[2,128], index: 5, kind: output, shape index: {}]
  %s6 = sld [smem:[#allocation0]]
  $region30: #{tpu_custom_call.1} parent=0
    _
  %s8 = ssub.s32 1, %s6
  %s9 = scalar_select 0, %s8, %s6
  %10 = sst [smem:[#allocation2]] %s4
  $region1: #{tpu_custom_call.1} parent=0
    #allocation3 [shape = 'u8[1024]{0}', space=vmem, size = 0x400, scoped, tag = 'output window, operand 0, single buffered']
    #allocation4 [shape = 's32[1]{0}', space=sflag, size = 0x4, scoped, tag = 'scoped memory for tpu_custom_call.1']
    %11 = vsyncpa [#allocation4], 0
    // Predicated region
    $region2: #{tpu_custom_call.1} parent=1 // pred_check
      _
    $region3: #{tpu_custom_call.1} parent=1 // pred_check_branch
      %13 = sbr.rel (0) target = $region5
    $region4: #{tpu_custom_call.1} parent=1 // pred_region
      _
    $region5: #{tpu_custom_call.1} parent=1 // pred_fallthru
      _
    // Predicated region
    $region6: #{tpu_custom_call.1} parent=1 // pred_check
      _
    $region7: #{tpu_custom_call.1} parent=1 // pred_check_branch
      %15 = sbr.rel (0) target = $region9
    $region8: #{tpu_custom_call.1} parent=1 // pred_region
      _
    $region9: #{tpu_custom_call.1} parent=1 // pred_fallthru
      _
    // Predicated region
    $region10: #{tpu_custom_call.1} parent=1 // pred_check
      _
    $region11: #{tpu_custom_call.1} parent=1 // pred_check_branch
      %17 = sbr.rel (0) target = $region13
    $region12: #{tpu_custom_call.1} parent=1 // pred_region
      _
    $region13: #{tpu_custom_call.1} parent=1 // pred_fallthru
      _
    // Predicated region
    $region14: #{tpu_custom_call.1} parent=1 // pred_check
      _
    $region15: #{tpu_custom_call.1} parent=1 // pred_check_branch
      %19 = sbr.rel (0) target = $region17
    $region16: #{tpu_custom_call.1} parent=1 // pred_region
      _
    $region17: #{tpu_custom_call.1} parent=1 // pred_fallthru
      _
    // Predicated region
    $region18: #{tpu_custom_call.1} parent=1 // pred_check
      _
    $region19: #{tpu_custom_call.1} parent=1 // pred_check_branch
      %21 = sbr.rel (0) target = $region21
    $region20: #{tpu_custom_call.1} parent=1 // pred_region
      _
    $region21: #{tpu_custom_call.1} parent=1 // pred_fallthru
      _
    %v22 = vld [vmem:[%s0] sm:$0xff]
    %v23 = vld [vmem:[%s0 + $0x8] sm:$0xff]
    %v24 = vld [vmem:[%s0 + $0x10] sm:$0xff]
    %v25 = vld [vmem:[%s0 + $0x18] sm:$0xff]
    %v26 = vld [vmem:[%s0 + $0x20] sm:$0xff]
    %v27 = vld [vmem:[%s0 + $0x28] sm:$0xff]
    %v28 = vld [vmem:[%s0 + $0x30] sm:$0xff]
    %v29 = vld [vmem:[%s0 + $0x38] sm:$0xff]
    %v30 = vld [vmem:[%s0 + $0x40] sm:$0xff]
    %v31 = vld [vmem:[%s0 + $0x48] sm:$0xff]
    %v32 = vld [vmem:[%s0 + $0x50] sm:$0xff]
    %v33 = vld [vmem:[%s0 + $0x58] sm:$0xff]
    %v34 = vld [vmem:[%s0 + $0x60] sm:$0xff]
    %v35 = vld [vmem:[%s0 + $0x68] sm:$0xff]
    %v36 = vld [vmem:[%s0 + $0x70] sm:$0xff]
    %v37 = vld [vmem:[%s0 + $0x78] sm:$0xff]
    %v38 = vld [vmem:[%s0 + $0x80] sm:$0xff]
    %v39 = vld [vmem:[%s0 + $0x88] sm:$0xff]
    %v40 = vld [vmem:[%s0 + $0x90] sm:$0xff]
    %v41 = vld [vmem:[%s0 + $0x98] sm:$0xff]
    %v42 = vld [vmem:[%s0 + $0xa0] sm:$0xff]
    %v43 = vld [vmem:[%s0 + $0xa8] sm:$0xff]
    %v44 = vld [vmem:[%s0 + $0xb0] sm:$0xff]
    %v45 = vld [vmem:[%s0 + $0xb8] sm:$0xff]
    %v46 = vld [vmem:[%s0 + $0xc0] sm:$0xff]
    %v47 = vld [vmem:[%s0 + $0xc8] sm:$0xff]
    %v48 = vld [vmem:[%s0 + $0xd0] sm:$0xff]
    %v49 = vld [vmem:[%s0 + $0xd8] sm:$0xff]
    %v50 = vld [vmem:[%s0 + $0xe0] sm:$0xff]
    %v51 = vld [vmem:[%s0 + $0xe8] sm:$0xff]
    %v52 = vld [vmem:[%s0 + $0xf0] sm:$0xff]
    %v53 = vld [vmem:[%s0 + $0xf8] sm:$0xff]
    %v54 = vld [vmem:[%s1] sm:$0xff]
    %v55 = vld [vmem:[%s1 + $0x8] sm:$0xff]
    %v56 = vld [vmem:[%s2] sm:$0x1]
    %v58 = vlaneseq
    %v59 = vshrl.u32 %v58, 7
    %v60 = vsub.s32 0, %v59
    %v61 = vrot.slane %v56, %v60
    %vm63 = vcmask 130048
    %v65 = vsel %vm63, %v22, 0
    %v68 = vsel %vm63, %v23, 0
    %v71 = vsel %vm63, %v24, 0
    %v74 = vsel %vm63, %v25, 0
    %v77 = vsel %vm63, %v26, 0
    %v80 = vsel %vm63, %v27, 0
    %v83 = vsel %vm63, %v28, 0
    %v86 = vsel %vm63, %v29, 0
    %v89 = vsel %vm63, %v30, 0
    %v92 = vsel %vm63, %v31, 0
    %v95 = vsel %vm63, %v32, 0
    %v98 = vsel %vm63, %v33, 0
    %v101 = vsel %vm63, %v34, 0
    %v104 = vsel %vm63, %v35, 0
    %v107 = vsel %vm63, %v36, 0
    %v110 = vsel %vm63, %v37, 0
    %v113 = vsel %vm63, %v38, 0
    %v116 = vsel %vm63, %v39, 0
    %v119 = vsel %vm63, %v40, 0
    %v122 = vsel %vm63, %v41, 0
    %v125 = vsel %vm63, %v42, 0
    %v128 = vsel %vm63, %v43, 0
    %v131 = vsel %vm63, %v44, 0
    %v134 = vsel %vm63, %v45, 0
    %v137 = vsel %vm63, %v46, 0
    %v140 = vsel %vm63, %v47, 0
    %v143 = vsel %vm63, %v48, 0
    %v146 = vsel %vm63, %v49, 0
    %v149 = vsel %vm63, %v50, 0
    %v152 = vsel %vm63, %v51, 0
    %v155 = vsel %vm63, %v52, 0
    %v158 = vsel %vm63, %v53, 0
    %160 = vmatprep.subr.mxu0 0.0
    %161 = vmatpush1.msra.mxu0 %v54
    %162 = vmatprep.subr.mxu0 0.0
    %163 = vmatpush1.msra.mxu0 %v55
    %164 = vmatprep.subr.mxu0 0.0
    %165 = vmatpush1.msra.mxu0 0.0
    %166 = vmatprep.subr.mxu0 0.0
    %167 = vmatpush1.msra.mxu0 0.0
    %168 = vmatprep.subr.mxu0 0.0
    %169 = vmatpush1.msra.mxu0 0.0
    %170 = vmatprep.subr.mxu0 0.0
    %171 = vmatpush1.msra.mxu0 0.0
    %172 = vmatprep.subr.mxu0 0.0
    %173 = vmatpush1.msra.mxu0 0.0
    %174 = vmatprep.subr.mxu0 0.0
    %175 = vmatpush1.msra.mxu0 0.0
    %176 = vmatprep.subr.mxu0 0.0
    %177 = vmatpush1.msra.mxu0 0.0
    %178 = vmatprep.subr.mxu0 0.0
    %179 = vmatpush1.msra.mxu0 0.0
    %180 = vmatprep.subr.mxu0 0.0
    %181 = vmatpush1.msra.mxu0 0.0
    %182 = vmatprep.subr.mxu0 0.0
    %183 = vmatpush1.msra.mxu0 0.0
    %184 = vmatprep.subr.mxu0 0.0
    %185 = vmatpush1.msra.mxu0 0.0
    %186 = vmatprep.subr.mxu0 0.0
    %187 = vmatpush1.msra.mxu0 0.0
    %188 = vmatprep.subr.mxu0 0.0
    %189 = vmatpush1.msra.mxu0 0.0
    %190 = vmatprep.subr.mxu0 0.0
    %191 = vmatpush1.msra.mxu0 0.0
    %192 = vmatprep.subr.mxu0 0.0
    %193 = vmatpush1.msra.mxu0 0.0
    %194 = vmatprep.subr.mxu0 0.0
    %195 = vmatpush1.msra.mxu0 0.0
    %196 = vmatprep.subr.mxu0 0.0
    %197 = vmatpush1.msra.mxu0 0.0
    %198 = vmatprep.subr.mxu0 0.0
    %199 = vmatpush1.msra.mxu0 0.0
    %200 = vmatprep.subr.mxu0 0.0
    %201 = vmatpush1.msra.mxu0 0.0
    %202 = vmatprep.subr.mxu0 0.0
    %203 = vmatpush1.msra.mxu0 0.0
    %204 = vmatprep.subr.mxu0 0.0
    %205 = vmatpush1.msra.mxu0 0.0
    %206 = vmatprep.subr.mxu0 0.0
    %207 = vmatpush1.msra.mxu0 0.0
    %208 = vmatprep.subr.mxu0 0.0
    %209 = vmatpush1.msra.mxu0 0.0
    %210 = vmatprep.subr.mxu0 0.0
    %211 = vmatpush1.msra.mxu0 0.0
    %212 = vmatprep.subr.mxu0 0.0
    %213 = vmatpush1.msra.mxu0 0.0
    %214 = vmatprep.subr.mxu0 0.0
    %215 = vmatpush1.msra.mxu0 0.0
    %216 = vmatprep.subr.mxu0 0.0
    %217 = vmatpush1.msra.mxu0 0.0
    %218 = vmatprep.subr.mxu0 0.0
    %219 = vmatpush1.msra.mxu0 0.0
    %220 = vmatprep.subr.mxu0 0.0
    %221 = vmatpush1.msra.mxu0 0.0
    %222 = vmatprep.subr.mxu0 0.0
    %223 = vmatpush1.msra.mxu0 0.0
    %224 = vmatprep.mubr.f32.mxu0 0.0
    %225 = vmatmul.mubr.f32.gmra.mrb[0].mxu0 %v65
    %v226 = vpop.f32.mrb[0].mxu0
    %v227 = vadd.f32 %v61, %v226
    %v228 = vpop.f32.mrb[0].mxu0
    %229 = vmatprep.mubr.f32.mxu0 0.0
    %230 = vmatmul.mubr.f32.gmra.mrb[0].mxu0 %v68
    %v231 = vpop.f32.mrb[0].mxu0
    %v232 = vadd.f32 %v61, %v231
    %v233 = vpop.f32.mrb[0].mxu0
    %234 = vmatprep.mubr.f32.mxu0 0.0
    %235 = vmatmul.mubr.f32.gmra.mrb[0].mxu0 %v71
    %v236 = vpop.f32.mrb[0].mxu0
    %v237 = vadd.f32 %v61, %v236
    %v238 = vpop.f32.mrb[0].mxu0
    %239 = vmatprep.mubr.f32.mxu0 0.0
    %240 = vmatmul.mubr.f32.gmra.mrb[0].mxu0 %v74
    %v241 = vpop.f32.mrb[0].mxu0
    %v242 = vadd.f32 %v61, %v241
    %v243 = vpop.f32.mrb[0].mxu0
    %244 = vmatprep.mubr.f32.mxu0 0.0
    %245 = vmatmul.mubr.f32.gmra.mrb[0].mxu0 %v77
    %v246 = vpop.f32.mrb[0].mxu0
    %v247 = vadd.f32 %v61, %v246
    %v248 = vpop.f32.mrb[0].mxu0
    %249 = vmatprep.mubr.f32.mxu0 0.0
    %250 = vmatmul.mubr.f32.gmra.mrb[0].mxu0 %v80
    %v251 = vpop.f32.mrb[0].mxu0
    %v252 = vadd.f32 %v61, %v251
    %v253 = vpop.f32.mrb[0].mxu0
    %254 = vmatprep.mubr.f32.mxu0 0.0
    %255 = vmatmul.mubr.f32.gmra.mrb[0].mxu0 %v83
    %v256 = vpop.f32.mrb[0].mxu0
    %v257 = vadd.f32 %v61, %v256
    %v258 = vpop.f32.mrb[0].mxu0
    %259 = vmatprep.mubr.f32.mxu0 0.0
    %260 = vmatmul.mubr.f32.gmra.mrb[0].mxu0 %v86
    %v261 = vpop.f32.mrb[0].mxu0
    %v262 = vadd.f32 %v61, %v261
    %v263 = vpop.f32.mrb[0].mxu0
    %264 = vmatprep.mubr.f32.mxu0 0.0
    %265 = vmatmul.mubr.f32.gmra.mrb[0].mxu0 %v89
    %v266 = vpop.f32.mrb[0].mxu0
    %v267 = vadd.f32 %v61, %v266
    %v268 = vpop.f32.mrb[0].mxu0
    %269 = vmatprep.mubr.f32.mxu0 0.0
    %270 = vmatmul.mubr.f32.gmra.mrb[0].mxu0 %v92
    %v271 = vpop.f32.mrb[0].mxu0
    %v272 = vadd.f32 %v61, %v271
    %v273 = vpop.f32.mrb[0].mxu0
    %274 = vmatprep.mubr.f32.mxu0 0.0
    %275 = vmatmul.mubr.f32.gmra.mrb[0].mxu0 %v95
    %v276 = vpop.f32.mrb[0].mxu0
    %v277 = vadd.f32 %v61, %v276
    %v278 = vpop.f32.mrb[0].mxu0
    %279 = vmatprep.mubr.f32.mxu0 0.0
    %280 = vmatmul.mubr.f32.gmra.mrb[0].mxu0 %v98
    %v281 = vpop.f32.mrb[0].mxu0
    %v282 = vadd.f32 %v61, %v281
    %v283 = vpop.f32.mrb[0].mxu0
    %284 = vmatprep.mubr.f32.mxu0 0.0
    %285 = vmatmul.mubr.f32.gmra.mrb[0].mxu0 %v101
    %v286 = vpop.f32.mrb[0].mxu0
    %v287 = vadd.f32 %v61, %v286
    %v288 = vpop.f32.mrb[0].mxu0
    %289 = vmatprep.mubr.f32.mxu0 0.0
    %290 = vmatmul.mubr.f32.gmra.mrb[0].mxu0 %v104
    %v291 = vpop.f32.mrb[0].mxu0
    %v292 = vadd.f32 %v61, %v291
    %v293 = vpop.f32.mrb[0].mxu0
    %294 = vmatprep.mubr.f32.mxu0 0.0
    %295 = vmatmul.mubr.f32.gmra.mrb[0].mxu0 %v107
    %v296 = vpop.f32.mrb[0].mxu0
    %v297 = vadd.f32 %v61, %v296
    %v298 = vpop.f32.mrb[0].mxu0
    %299 = vmatprep.mubr.f32.mxu0 0.0
    %300 = vmatmul.mubr.f32.gmra.mrb[0].mxu0 %v110
    %v301 = vpop.f32.mrb[0].mxu0
    %v302 = vadd.f32 %v61, %v301
    %v303 = vpop.f32.mrb[0].mxu0
    %304 = vmatprep.mubr.f32.mxu0 0.0
    %305 = vmatmul.mubr.f32.gmra.mrb[0].mxu0 %v113
    %v306 = vpop.f32.mrb[0].mxu0
    %v307 = vadd.f32 %v61, %v306
    %v308 = vpop.f32.mrb[0].mxu0
    %309 = vmatprep.mubr.f32.mxu0 0.0
    %310 = vmatmul.mubr.f32.gmra.mrb[0].mxu0 %v116
    %v311 = vpop.f32.mrb[0].mxu0
    %v312 = vadd.f32 %v61, %v311
    %v313 = vpop.f32.mrb[0].mxu0
    %314 = vmatprep.mubr.f32.mxu0 0.0
    %315 = vmatmul.mubr.f32.gmra.mrb[0].mxu0 %v119
    %v316 = vpop.f32.mrb[0].mxu0
    %v317 = vadd.f32 %v61, %v316
    %v318 = vpop.f32.mrb[0].mxu0
    %319 = vmatprep.mubr.f32.mxu0 0.0
    %320 = vmatmul.mubr.f32.gmra.mrb[0].mxu0 %v122
    %v321 = vpop.f32.mrb[0].mxu0
    %v322 = vadd.f32 %v61, %v321
    %v323 = vpop.f32.mrb[0].mxu0
    %324 = vmatprep.mubr.f32.mxu0 0.0
    %325 = vmatmul.mubr.f32.gmra.mrb[0].mxu0 %v125
    %v326 = vpop.f32.mrb[0].mxu0
    %v327 = vadd.f32 %v61, %v326
    %v328 = vpop.f32.mrb[0].mxu0
    %329 = vmatprep.mubr.f32.mxu0 0.0
    %330 = vmatmul.mubr.f32.gmra.mrb[0].mxu0 %v128
    %v331 = vpop.f32.mrb[0].mxu0
    %v332 = vadd.f32 %v61, %v331
    %v333 = vpop.f32.mrb[0].mxu0
    %334 = vmatprep.mubr.f32.mxu0 0.0
    %335 = vmatmul.mubr.f32.gmra.mrb[0].mxu0 %v131
    %v336 = vpop.f32.mrb[0].mxu0
    %v337 = vadd.f32 %v61, %v336
    %v338 = vpop.f32.mrb[0].mxu0
    %339 = vmatprep.mubr.f32.mxu0 0.0
    %340 = vmatmul.mubr.f32.gmra.mrb[0].mxu0 %v134
    %v341 = vpop.f32.mrb[0].mxu0
    %v342 = vadd.f32 %v61, %v341
    %v343 = vpop.f32.mrb[0].mxu0
    %344 = vmatprep.mubr.f32.mxu0 0.0
    %345 = vmatmul.mubr.f32.gmra.mrb[0].mxu0 %v137
    %v346 = vpop.f32.mrb[0].mxu0
    %v347 = vadd.f32 %v61, %v346
    %v348 = vpop.f32.mrb[0].mxu0
    %349 = vmatprep.mubr.f32.mxu0 0.0
    %350 = vmatmul.mubr.f32.gmra.mrb[0].mxu0 %v140
    %v351 = vpop.f32.mrb[0].mxu0
    %v352 = vadd.f32 %v61, %v351
    %v353 = vpop.f32.mrb[0].mxu0
    %354 = vmatprep.mubr.f32.mxu0 0.0
    %355 = vmatmul.mubr.f32.gmra.mrb[0].mxu0 %v143
    %v356 = vpop.f32.mrb[0].mxu0
    %v357 = vadd.f32 %v61, %v356
    %v358 = vpop.f32.mrb[0].mxu0
    %359 = vmatprep.mubr.f32.mxu0 0.0
    %360 = vmatmul.mubr.f32.gmra.mrb[0].mxu0 %v146
    %v361 = vpop.f32.mrb[0].mxu0
    %v362 = vadd.f32 %v61, %v361
    %v363 = vpop.f32.mrb[0].mxu0
    %364 = vmatprep.mubr.f32.mxu0 0.0
    %365 = vmatmul.mubr.f32.gmra.mrb[0].mxu0 %v149
    %v366 = vpop.f32.mrb[0].mxu0
    %v367 = vadd.f32 %v61, %v366
    %v368 = vpop.f32.mrb[0].mxu0
    %369 = vmatprep.mubr.f32.mxu0 0.0
    %370 = vmatmul.mubr.f32.gmra.mrb[0].mxu0 %v152
    %v371 = vpop.f32.mrb[0].mxu0
    %v372 = vadd.f32 %v61, %v371
    %v373 = vpop.f32.mrb[0].mxu0
    %374 = vmatprep.mubr.f32.mxu0 0.0
    %375 = vmatmul.mubr.f32.gmra.mrb[0].mxu0 %v155
    %v376 = vpop.f32.mrb[0].mxu0
    %v377 = vadd.f32 %v61, %v376
    %v378 = vpop.f32.mrb[0].mxu0
    %379 = vmatprep.mubr.f32.mxu0 0.0
    %380 = vmatmul.mubr.f32.gmra.mrb[0].mxu0 %v158
    %v381 = vpop.f32.mrb[0].mxu0
    %v382 = vadd.f32 %v61, %v381
    %v383 = vpop.f32.mrb[0].mxu0
    %384 = vdwg.mxu0
    %v385 = vmax.f32 %v227, 0.0
    %v386 = vmax.f32 %v232, 0.0
    %v387 = vmax.f32 %v237, 0.0
    %v388 = vmax.f32 %v242, 0.0
    %v389 = vmax.f32 %v247, 0.0
    %v390 = vmax.f32 %v252, 0.0
    %v391 = vmax.f32 %v257, 0.0
    %v392 = vmax.f32 %v262, 0.0
    %v393 = vmax.f32 %v267, 0.0
    %v394 = vmax.f32 %v272, 0.0
    %v395 = vmax.f32 %v277, 0.0
    %v396 = vmax.f32 %v282, 0.0
    %v397 = vmax.f32 %v287, 0.0
    %v398 = vmax.f32 %v292, 0.0
    %v399 = vmax.f32 %v297, 0.0
    %v400 = vmax.f32 %v302, 0.0
    %v401 = vmax.f32 %v307, 0.0
    %v402 = vmax.f32 %v312, 0.0
    %v403 = vmax.f32 %v317, 0.0
    %v404 = vmax.f32 %v322, 0.0
    %v405 = vmax.f32 %v327, 0.0
    %v406 = vmax.f32 %v332, 0.0
    %v407 = vmax.f32 %v337, 0.0
    %v408 = vmax.f32 %v342, 0.0
    %v409 = vmax.f32 %v347, 0.0
    %v410 = vmax.f32 %v352, 0.0
    %v411 = vmax.f32 %v357, 0.0
    %v412 = vmax.f32 %v362, 0.0
    %v413 = vmax.f32 %v367, 0.0
    %v414 = vmax.f32 %v372, 0.0
    %v415 = vmax.f32 %v377, 0.0
    %v416 = vmax.f32 %v382, 0.0
    %v417 = vld [vmem:[%s3] sm:$0x1]
    %v419 = vlaneseq
    %v420 = vshrl.u32 %v419, 7
    %v421 = vsub.s32 0, %v420
    %v422 = vrot.slane %v417, %v421
    %v424 = vmul.f32 %v385, %v422
    %v425 = vmul.f32 %v386, %v422
    %v426 = vmul.f32 %v387, %v422
    %v427 = vmul.f32 %v388, %v422
    %v428 = vmul.f32 %v389, %v422
    %v429 = vmul.f32 %v390, %v422
    %v430 = vmul.f32 %v391, %v422
    %v431 = vmul.f32 %v392, %v422
    %v432 = vmul.f32 %v393, %v422
    %v433 = vmul.f32 %v394, %v422
    %v434 = vmul.f32 %v395, %v422
    %v435 = vmul.f32 %v396, %v422
    %v436 = vmul.f32 %v397, %v422
    %v437 = vmul.f32 %v398, %v422
    %v438 = vmul.f32 %v399, %v422
    %v439 = vmul.f32 %v400, %v422
    %v440 = vmul.f32 %v401, %v422
    %v441 = vmul.f32 %v402, %v422
    %v442 = vmul.f32 %v403, %v422
    %v443 = vmul.f32 %v404, %v422
    %v444 = vmul.f32 %v405, %v422
    %v445 = vmul.f32 %v406, %v422
    %v446 = vmul.f32 %v407, %v422
    %v447 = vmul.f32 %v408, %v422
    %v448 = vmul.f32 %v409, %v422
    %v449 = vmul.f32 %v410, %v422
    %v450 = vmul.f32 %v411, %v422
    %v451 = vmul.f32 %v412, %v422
    %v452 = vmul.f32 %v413, %v422
    %v453 = vmul.f32 %v414, %v422
    %v454 = vmul.f32 %v415, %v422
    %v455 = vmul.f32 %v416, %v422
    %vm456 = vcmask 261120
    %v457 = vsel %vm456, %v424, 0.0
    %458 = vadd.xlane.f32.xlu0 %v457
    %v459 = vpop.xlane.xlu0 %458
    %v460 = vsel %vm456, %v425, 0.0
    %461 = vadd.xlane.f32.xlu0 %v460
    %v462 = vpop.xlane.xlu0 %461
    %v463 = vsel %vm456, %v426, 0.0
    %464 = vadd.xlane.f32.xlu0 %v463
    %v465 = vpop.xlane.xlu0 %464
    %v466 = vsel %vm456, %v427, 0.0
    %467 = vadd.xlane.f32.xlu0 %v466
    %v468 = vpop.xlane.xlu0 %467
    %v469 = vsel %vm456, %v428, 0.0
    %470 = vadd.xlane.f32.xlu0 %v469
    %v471 = vpop.xlane.xlu0 %470
    %v472 = vsel %vm456, %v429, 0.0
    %473 = vadd.xlane.f32.xlu0 %v472
    %v474 = vpop.xlane.xlu0 %473
    %v475 = vsel %vm456, %v430, 0.0
    %476 = vadd.xlane.f32.xlu0 %v475
    %v477 = vpop.xlane.xlu0 %476
    %v478 = vsel %vm456, %v431, 0.0
    %479 = vadd.xlane.f32.xlu0 %v478
    %v480 = vpop.xlane.xlu0 %479
    %v481 = vsel %vm456, %v432, 0.0
    %482 = vadd.xlane.f32.xlu0 %v481
    %v483 = vpop.xlane.xlu0 %482
    %v484 = vsel %vm456, %v433, 0.0
    %485 = vadd.xlane.f32.xlu0 %v484
    %v486 = vpop.xlane.xlu0 %485
    %v487 = vsel %vm456, %v434, 0.0
    %488 = vadd.xlane.f32.xlu0 %v487
    %v489 = vpop.xlane.xlu0 %488
    %v490 = vsel %vm456, %v435, 0.0
    %491 = vadd.xlane.f32.xlu0 %v490
    %v492 = vpop.xlane.xlu0 %491
    %v493 = vsel %vm456, %v436, 0.0
    %494 = vadd.xlane.f32.xlu0 %v493
    %v495 = vpop.xlane.xlu0 %494
    %v496 = vsel %vm456, %v437, 0.0
    %497 = vadd.xlane.f32.xlu0 %v496
    %v498 = vpop.xlane.xlu0 %497
    %v499 = vsel %vm456, %v438, 0.0
    %500 = vadd.xlane.f32.xlu0 %v499
    %v501 = vpop.xlane.xlu0 %500
    %v502 = vsel %vm456, %v439, 0.0
    %503 = vadd.xlane.f32.xlu0 %v502
    %v504 = vpop.xlane.xlu0 %503
    %v505 = vsel %vm456, %v440, 0.0
    %506 = vadd.xlane.f32.xlu0 %v505
    %v507 = vpop.xlane.xlu0 %506
    %v508 = vsel %vm456, %v441, 0.0
    %509 = vadd.xlane.f32.xlu0 %v508
    %v510 = vpop.xlane.xlu0 %509
    %v511 = vsel %vm456, %v442, 0.0
    %512 = vadd.xlane.f32.xlu0 %v511
    %v513 = vpop.xlane.xlu0 %512
    %v514 = vsel %vm456, %v443, 0.0
    %515 = vadd.xlane.f32.xlu0 %v514
    %v516 = vpop.xlane.xlu0 %515
    %v517 = vsel %vm456, %v444, 0.0
    %518 = vadd.xlane.f32.xlu0 %v517
    %v519 = vpop.xlane.xlu0 %518
    %v520 = vsel %vm456, %v445, 0.0
    %521 = vadd.xlane.f32.xlu0 %v520
    %v522 = vpop.xlane.xlu0 %521
    %v523 = vsel %vm456, %v446, 0.0
    %524 = vadd.xlane.f32.xlu0 %v523
    %v525 = vpop.xlane.xlu0 %524
    %v526 = vsel %vm456, %v447, 0.0
    %527 = vadd.xlane.f32.xlu0 %v526
    %v528 = vpop.xlane.xlu0 %527
    %v529 = vsel %vm456, %v448, 0.0
    %530 = vadd.xlane.f32.xlu0 %v529
    %v531 = vpop.xlane.xlu0 %530
    %v532 = vsel %vm456, %v449, 0.0
    %533 = vadd.xlane.f32.xlu0 %v532
    %v534 = vpop.xlane.xlu0 %533
    %v535 = vsel %vm456, %v450, 0.0
    %536 = vadd.xlane.f32.xlu0 %v535
    %v537 = vpop.xlane.xlu0 %536
    %v538 = vsel %vm456, %v451, 0.0
    %539 = vadd.xlane.f32.xlu0 %v538
    %v540 = vpop.xlane.xlu0 %539
    %v541 = vsel %vm456, %v452, 0.0
    %542 = vadd.xlane.f32.xlu0 %v541
    %v543 = vpop.xlane.xlu0 %542
    %v544 = vsel %vm456, %v453, 0.0
    %545 = vadd.xlane.f32.xlu0 %v544
    %v546 = vpop.xlane.xlu0 %545
    %v547 = vsel %vm456, %v454, 0.0
    %548 = vadd.xlane.f32.xlu0 %v547
    %v549 = vpop.xlane.xlu0 %548
    %v550 = vsel %vm456, %v455, 0.0
    %551 = vadd.xlane.f32.xlu0 %v550
    %v552 = vpop.xlane.xlu0 %551
    %s553 = sld [smem:[#allocation2]]
    %v554 = vstv %s553
    %v555 = vadd.f32 %v459, %v554
    %v556 = vadd.f32 %v462, %v554
    %v557 = vadd.f32 %v465, %v554
    %v558 = vadd.f32 %v468, %v554
    %v559 = vadd.f32 %v471, %v554
    %v560 = vadd.f32 %v474, %v554
    %v561 = vadd.f32 %v477, %v554
    %v562 = vadd.f32 %v480, %v554
    %v563 = vadd.f32 %v483, %v554
    %v564 = vadd.f32 %v486, %v554
    %v565 = vadd.f32 %v489, %v554
    %v566 = vadd.f32 %v492, %v554
    %v567 = vadd.f32 %v495, %v554
    %v568 = vadd.f32 %v498, %v554
    %v569 = vadd.f32 %v501, %v554
    %v570 = vadd.f32 %v504, %v554
    %v571 = vadd.f32 %v507, %v554
    %v572 = vadd.f32 %v510, %v554
    %v573 = vadd.f32 %v513, %v554
    %v574 = vadd.f32 %v516, %v554
    %v575 = vadd.f32 %v519, %v554
    %v576 = vadd.f32 %v522, %v554
    %v577 = vadd.f32 %v525, %v554
    %v578 = vadd.f32 %v528, %v554
    %v579 = vadd.f32 %v531, %v554
    %v580 = vadd.f32 %v534, %v554
    %v581 = vadd.f32 %v537, %v554
    %v582 = vadd.f32 %v540, %v554
    %v583 = vadd.f32 %v543, %v554
    %v584 = vadd.f32 %v546, %v554
    %v585 = vadd.f32 %v549, %v554
    %v586 = vadd.f32 %v552, %v554
    %v619 = vlaneseq
    %v620 = vand.u32 %v619, 127
    %v621 = vlaneseq
    %v622 = vshrl.u32 %v621, 7
    %v623 = vsub.s32 %v620, %v622
    %v624 = vrot.slane %v555, %v623
    %v625 = vadd.s32 %v620, 4294967288
    %v626 = vlaneseq
    %v627 = vshrl.u32 %v626, 7
    %v628 = vsub.s32 %v625, %v627
    %v629 = vrot.slane %v556, %v628
    %vm630 = vcmask 130112
    %v631 = vsel %vm630, %v629, %v624
    %v632 = vadd.s32 %v620, 4294967280
    %v633 = vlaneseq
    %v634 = vshrl.u32 %v633, 7
    %v635 = vsub.s32 %v632, %v634
    %v636 = vrot.slane %v557, %v635
    %vm637 = vcmask 195712
    %v638 = vsel %vm637, %v636, %v631
    %v639 = vadd.s32 %v620, 4294967272
    %v640 = vlaneseq
    %v641 = vshrl.u32 %v640, 7
    %v642 = vsub.s32 %v639, %v641
    %v643 = vrot.slane %v558, %v642
    %vm644 = vcmask 261312
    %v645 = vsel %vm644, %v643, %v638
    %v646 = vadd.s32 %v620, 4294967264
    %v647 = vlaneseq
    %v648 = vshrl.u32 %v647, 7
    %v649 = vsub.s32 %v646, %v648
    %v650 = vrot.slane %v559, %v649
    %vm651 = vcmask 326912
    %v652 = vsel %vm651, %v650, %v645
    %v653 = vadd.s32 %v620, 4294967256
    %v654 = vlaneseq
    %v655 = vshrl.u32 %v654, 7
    %v656 = vsub.s32 %v653, %v655
    %v657 = vrot.slane %v560, %v656
    %vm658 = vcmask 392512
    %v659 = vsel %vm658, %v657, %v652
    %v660 = vadd.s32 %v620, 4294967248
    %v661 = vlaneseq
    %v662 = vshrl.u32 %v661, 7
    %v663 = vsub.s32 %v660, %v662
    %v664 = vrot.slane %v561, %v663
    %vm665 = vcmask 458112
    %v666 = vsel %vm665, %v664, %v659
    %v667 = vadd.s32 %v620, 4294967240
    %v668 = vlaneseq
    %v669 = vshrl.u32 %v668, 7
    %v670 = vsub.s32 %v667, %v669
    %v671 = vrot.slane %v562, %v670
    %vm672 = vcmask 523712
    %v673 = vsel %vm672, %v671, %v666
    %v674 = vadd.s32 %v620, 4294967232
    %v675 = vlaneseq
    %v676 = vshrl.u32 %v675, 7
    %v677 = vsub.s32 %v674, %v676
    %v678 = vrot.slane %v563, %v677
    %vm679 = vcmask 589312
    %v680 = vsel %vm679, %v678, %v673
    %v681 = vadd.s32 %v620, 4294967224
    %v682 = vlaneseq
    %v683 = vshrl.u32 %v682, 7
    %v684 = vsub.s32 %v681, %v683
    %v685 = vrot.slane %v564, %v684
    %vm686 = vcmask 654912
    %v687 = vsel %vm686, %v685, %v680
    %v688 = vadd.s32 %v620, 4294967216
    %v689 = vlaneseq
    %v690 = vshrl.u32 %v689, 7
    %v691 = vsub.s32 %v688, %v690
    %v692 = vrot.slane %v565, %v691
    %vm693 = vcmask 720512
    %v694 = vsel %vm693, %v692, %v687
    %v695 = vadd.s32 %v620, 4294967208
    %v696 = vlaneseq
    %v697 = vshrl.u32 %v696, 7
    %v698 = vsub.s32 %v695, %v697
    %v699 = vrot.slane %v566, %v698
    %vm700 = vcmask 786112
    %v701 = vsel %vm700, %v699, %v694
    %v702 = vadd.s32 %v620, 4294967200
    %v703 = vlaneseq
    %v704 = vshrl.u32 %v703, 7
    %v705 = vsub.s32 %v702, %v704
    %v706 = vrot.slane %v567, %v705
    %vm707 = vcmask 851712
    %v708 = vsel %vm707, %v706, %v701
    %v709 = vadd.s32 %v620, 4294967192
    %v710 = vlaneseq
    %v711 = vshrl.u32 %v710, 7
    %v712 = vsub.s32 %v709, %v711
    %v713 = vrot.slane %v568, %v712
    %vm714 = vcmask 917312
    %v715 = vsel %vm714, %v713, %v708
    %v716 = vadd.s32 %v620, 4294967184
    %v717 = vlaneseq
    %v718 = vshrl.u32 %v717, 7
    %v719 = vsub.s32 %v716, %v718
    %v720 = vrot.slane %v569, %v719
    %vm721 = vcmask 982912
    %v722 = vsel %vm721, %v720, %v715
    %v723 = vadd.s32 %v620, 4294967176
    %v724 = vlaneseq
    %v725 = vshrl.u32 %v724, 7
    %v726 = vsub.s32 %v723, %v725
    %v727 = vrot.slane %v570, %v726
    %vm728 = vcmask 1048512
    %v729 = vsel %vm728, %v727, %v722
    %v730 = vlaneseq
    %v731 = vshrl.u32 %v730, 7
    %v732 = vsub.s32 %v620, %v731
    %v733 = vrot.slane %v571, %v732
    %v734 = vlaneseq
    %v735 = vshrl.u32 %v734, 7
    %v736 = vsub.s32 %v625, %v735
    %v737 = vrot.slane %v572, %v736
    %v738 = vsel %vm630, %v737, %v733
    %v739 = vlaneseq
    %v740 = vshrl.u32 %v739, 7
    %v741 = vsub.s32 %v632, %v740
    %v742 = vrot.slane %v573, %v741
    %v743 = vsel %vm637, %v742, %v738
    %v744 = vlaneseq
    %v745 = vshrl.u32 %v744, 7
    %v746 = vsub.s32 %v639, %v745
    %v747 = vrot.slane %v574, %v746
    %v748 = vsel %vm644, %v747, %v743
    %v749 = vlaneseq
    %v750 = vshrl.u32 %v749, 7
    %v751 = vsub.s32 %v646, %v750
    %v752 = vrot.slane %v575, %v751
    %v753 = vsel %vm651, %v752, %v748
    %v754 = vlaneseq
    %v755 = vshrl.u32 %v754, 7
    %v756 = vsub.s32 %v653, %v755
    %v757 = vrot.slane %v576, %v756
    %v758 = vsel %vm658, %v757, %v753
    %v759 = vlaneseq
    %v760 = vshrl.u32 %v759, 7
    %v761 = vsub.s32 %v660, %v760
    %v762 = vrot.slane %v577, %v761
    %v763 = vsel %vm665, %v762, %v758
    %v764 = vlaneseq
    %v765 = vshrl.u32 %v764, 7
    %v766 = vsub.s32 %v667, %v765
    %v767 = vrot.slane %v578, %v766
    %v768 = vsel %vm672, %v767, %v763
    %v769 = vlaneseq
    %v770 = vshrl.u32 %v769, 7
    %v771 = vsub.s32 %v674, %v770
    %v772 = vrot.slane %v579, %v771
    %v773 = vsel %vm679, %v772, %v768
    %v774 = vlaneseq
    %v775 = vshrl.u32 %v774, 7
    %v776 = vsub.s32 %v681, %v775
    %v777 = vrot.slane %v580, %v776
    %v778 = vsel %vm686, %v777, %v773
    %v779 = vlaneseq
    %v780 = vshrl.u32 %v779, 7
    %v781 = vsub.s32 %v688, %v780
    %v782 = vrot.slane %v581, %v781
    %v783 = vsel %vm693, %v782, %v778
    %v784 = vlaneseq
    %v785 = vshrl.u32 %v784, 7
    %v786 = vsub.s32 %v695, %v785
    %v787 = vrot.slane %v582, %v786
    %v788 = vsel %vm700, %v787, %v783
    %v789 = vlaneseq
    %v790 = vshrl.u32 %v789, 7
    %v791 = vsub.s32 %v702, %v790
    %v792 = vrot.slane %v583, %v791
    %v793 = vsel %vm707, %v792, %v788
    %v794 = vlaneseq
    %v795 = vshrl.u32 %v794, 7
    %v796 = vsub.s32 %v709, %v795
    %v797 = vrot.slane %v584, %v796
    %v798 = vsel %vm714, %v797, %v793
    %v799 = vlaneseq
    %v800 = vshrl.u32 %v799, 7
    %v801 = vsub.s32 %v716, %v800
    %v802 = vrot.slane %v585, %v801
    %v803 = vsel %vm721, %v802, %v798
    %v804 = vlaneseq
    %v805 = vshrl.u32 %v804, 7
    %v806 = vsub.s32 %v723, %v805
    %v807 = vrot.slane %v586, %v806
    %v808 = vsel %vm728, %v807, %v803
    %vm809 = vcmask 1041409
    %v810 = vsel %vm809, %v808, %v729
    %812 = vst [vmem:[#allocation3] sm:$0x3] %v810
    // Predicated region
    $region22: #{tpu_custom_call.1} parent=1 // pred_check
      _
    $region23: #{tpu_custom_call.1} parent=1 // pred_check_branch
      %814 = sbr.rel (0) target = $region25
    $region24: #{tpu_custom_call.1} parent=1 // pred_region
      %s816 = ssub.s32 32, 32
      %817 = vsyncadd [#allocation4], %s816
      %s819 = sshll.u32 [#allocation3], 4
      %s820 = int_to_ptr.vmem [resolvable:$true] %s819
      %822 = dma.vmem_to_hbm [thread:$0]  %s820, 32, %s5, [#allocation4]
    $region25: #{tpu_custom_call.1} parent=1 // pred_fallthru
      _
    // Predicated region
    $region26: #{tpu_custom_call.1} parent=1 // pred_check
      _
    $region27: #{tpu_custom_call.1} parent=1 // pred_check_branch
      %824 = sbr.rel (0) target = $region29
    $region28: #{tpu_custom_call.1} parent=1 // pred_region
      %825 = dma.done [#allocation4], 32
    $region29: #{tpu_custom_call.1} parent=1 // pred_fallthru
      _
    %826 = vsyncpa [#allocation4], 1

// kernel: tpu_custom_call.1
$region0: #{tpu_custom_call.1}
  #allocation0 [shape = 'u32[]', space=smem, size = 0x4, offset = 0x4, fixed_abs, tag = 'smem constant byte address 0x4 - core index']
  #allocation1 [shape = 'u32[144,128]{1,0:T(1,128)}', space=vmem, size = 0x12000, scoped, tag = 'internal scratch']
  #allocation2 [shape = 'f32[1,1]{1,0:T(1,128)S(6)}', space=smem, size = 0x200, scoped, tag = 'scoped memory for tpu_custom_call.1']
  %s0 = inlined_call_operand.vmem [shape: f32[256,16], index: 0, kind: input, shape index: {}]
  %s1 = inlined_call_operand.vmem [shape: f32[16,32], index: 1, kind: input, shape index: {}]
  %s2 = inlined_call_operand.vmem [shape: f32[1,32], index: 2, kind: input, shape index: {}]
  %s3 = inlined_call_operand.vmem [shape: f32[1,32], index: 3, kind: input, shape index: {}]
  %s4 = inlined_call_operand.<no memory space> [shape: f32[1,1], index: 4, kind: input, shape index: {}]
  %s5 = inlined_call_operand.hbm [shape: f32[2,128], index: 5, kind: output, shape index: {}]
  %s6 = sld [smem:[#allocation0]]
  $region30: #{tpu_custom_call.1} parent=0
    _
  %s8 = ssub.s32 1, %s6
  %s9 = scalar_select 0, %s8, %s6
  %10 = sst [smem:[#allocation2]] %s4
  $region1: #{tpu_custom_call.1} parent=0
    #allocation3 [shape = 'u8[1024]{0}', space=vmem, size = 0x400, scoped, tag = 'output window, operand 0, single buffered']
    #allocation4 [shape = 's32[1]{0}', space=sflag, size = 0x4, scoped, tag = 'scoped memory for tpu_custom_call.1']
    %11 = vsyncpa [#allocation4], 0
    // Predicated region
    $region2: #{tpu_custom_call.1} parent=1 // pred_check
      _
    $region3: #{tpu_custom_call.1} parent=1 // pred_check_branch
      %13 = sbr.rel (0) target = $region5
    $region4: #{tpu_custom_call.1} parent=1 // pred_region
      _
    $region5: #{tpu_custom_call.1} parent=1 // pred_fallthru
      _
    // Predicated region
    $region6: #{tpu_custom_call.1} parent=1 // pred_check
      _
    $region7: #{tpu_custom_call.1} parent=1 // pred_check_branch
      %15 = sbr.rel (0) target = $region9
    $region8: #{tpu_custom_call.1} parent=1 // pred_region
      _
    $region9: #{tpu_custom_call.1} parent=1 // pred_fallthru
      _
    // Predicated region
    $region10: #{tpu_custom_call.1} parent=1 // pred_check
      _
    $region11: #{tpu_custom_call.1} parent=1 // pred_check_branch
      %17 = sbr.rel (0) target = $region13
    $region12: #{tpu_custom_call.1} parent=1 // pred_region
      _
    $region13: #{tpu_custom_call.1} parent=1 // pred_fallthru
      _
    // Predicated region
    $region14: #{tpu_custom_call.1} parent=1 // pred_check
      _
    $region15: #{tpu_custom_call.1} parent=1 // pred_check_branch
      %19 = sbr.rel (0) target = $region17
    $region16: #{tpu_custom_call.1} parent=1 // pred_region
      _
    $region17: #{tpu_custom_call.1} parent=1 // pred_fallthru
      _
    // Predicated region
    $region18: #{tpu_custom_call.1} parent=1 // pred_check
      _
    $region19: #{tpu_custom_call.1} parent=1 // pred_check_branch
      %21 = sbr.rel (0) target = $region21
    $region20: #{tpu_custom_call.1} parent=1 // pred_region
      _
    $region21: #{tpu_custom_call.1} parent=1 // pred_fallthru
      _
    %v22 = vld [vmem:[%s0] sm:$0xff]
    %v23 = vld [vmem:[%s0 + $0x8] sm:$0xff]
    %v24 = vld [vmem:[%s0 + $0x10] sm:$0xff]
    %v25 = vld [vmem:[%s0 + $0x18] sm:$0xff]
    %v26 = vld [vmem:[%s0 + $0x20] sm:$0xff]
    %v27 = vld [vmem:[%s0 + $0x28] sm:$0xff]
    %v28 = vld [vmem:[%s0 + $0x30] sm:$0xff]
    %v29 = vld [vmem:[%s0 + $0x38] sm:$0xff]
    %v30 = vld [vmem:[%s0 + $0x40] sm:$0xff]
    %v31 = vld [vmem:[%s0 + $0x48] sm:$0xff]
    %v32 = vld [vmem:[%s0 + $0x50] sm:$0xff]
    %v33 = vld [vmem:[%s0 + $0x58] sm:$0xff]
    %v34 = vld [vmem:[%s0 + $0x60] sm:$0xff]
    %v35 = vld [vmem:[%s0 + $0x68] sm:$0xff]
    %v36 = vld [vmem:[%s0 + $0x70] sm:$0xff]
    %v37 = vld [vmem:[%s0 + $0x78] sm:$0xff]
    %v38 = vld [vmem:[%s0 + $0x80] sm:$0xff]
    %v39 = vld [vmem:[%s0 + $0x88] sm:$0xff]
    %v40 = vld [vmem:[%s0 + $0x90] sm:$0xff]
    %v41 = vld [vmem:[%s0 + $0x98] sm:$0xff]
    %v42 = vld [vmem:[%s0 + $0xa0] sm:$0xff]
    %v43 = vld [vmem:[%s0 + $0xa8] sm:$0xff]
    %v44 = vld [vmem:[%s0 + $0xb0] sm:$0xff]
    %v45 = vld [vmem:[%s0 + $0xb8] sm:$0xff]
    %v46 = vld [vmem:[%s0 + $0xc0] sm:$0xff]
    %v47 = vld [vmem:[%s0 + $0xc8] sm:$0xff]
    %v48 = vld [vmem:[%s0 + $0xd0] sm:$0xff]
    %v49 = vld [vmem:[%s0 + $0xd8] sm:$0xff]
    %v50 = vld [vmem:[%s0 + $0xe0] sm:$0xff]
    %v51 = vld [vmem:[%s0 + $0xe8] sm:$0xff]
    %v52 = vld [vmem:[%s0 + $0xf0] sm:$0xff]
    %v53 = vld [vmem:[%s0 + $0xf8] sm:$0xff]
    %v54 = vld [vmem:[%s1] sm:$0xff]
    %v55 = vld [vmem:[%s1 + $0x8] sm:$0xff]
    %v56 = vld [vmem:[%s2] sm:$0x1]
    %v58 = vlaneseq
    %v59 = vshrl.u32 %v58, 7
    %v60 = vsub.s32 0, %v59
    %v61 = vrot.slane %v56, %v60
    %vm63 = vcmask 130048
    %v65 = vsel %vm63, %v22, 0
    %v68 = vsel %vm63, %v23, 0
    %v71 = vsel %vm63, %v24, 0
    %v74 = vsel %vm63, %v25, 0
    %v77 = vsel %vm63, %v26, 0
    %v80 = vsel %vm63, %v27, 0
    %v83 = vsel %vm63, %v28, 0
    %v86 = vsel %vm63, %v29, 0
    %v89 = vsel %vm63, %v30, 0
    %v92 = vsel %vm63, %v31, 0
    %v95 = vsel %vm63, %v32, 0
    %v98 = vsel %vm63, %v33, 0
    %v101 = vsel %vm63, %v34, 0
    %v104 = vsel %vm63, %v35, 0
    %v107 = vsel %vm63, %v36, 0
    %v110 = vsel %vm63, %v37, 0
    %v113 = vsel %vm63, %v38, 0
    %v116 = vsel %vm63, %v39, 0
    %v119 = vsel %vm63, %v40, 0
    %v122 = vsel %vm63, %v41, 0
    %v125 = vsel %vm63, %v42, 0
    %v128 = vsel %vm63, %v43, 0
    %v131 = vsel %vm63, %v44, 0
    %v134 = vsel %vm63, %v45, 0
    %v137 = vsel %vm63, %v46, 0
    %v140 = vsel %vm63, %v47, 0
    %v143 = vsel %vm63, %v48, 0
    %v146 = vsel %vm63, %v49, 0
    %v149 = vsel %vm63, %v50, 0
    %v152 = vsel %vm63, %v51, 0
    %v155 = vsel %vm63, %v52, 0
    %v158 = vsel %vm63, %v53, 0
    %160 = vmatprep.subr.mxu0 0.0
    %161 = vmatpush1.msra.mxu0 %v54
    %162 = vmatprep.subr.mxu0 0.0
    %163 = vmatpush1.msra.mxu0 %v55
    %164 = vmatprep.subr.mxu0 0.0
    %165 = vmatpush1.msra.mxu0 0.0
    %166 = vmatprep.subr.mxu0 0.0
    %167 = vmatpush1.msra.mxu0 0.0
    %168 = vmatprep.subr.mxu0 0.0
    %169 = vmatpush1.msra.mxu0 0.0
    %170 = vmatprep.subr.mxu0 0.0
    %171 = vmatpush1.msra.mxu0 0.0
    %172 = vmatprep.subr.mxu0 0.0
    %173 = vmatpush1.msra.mxu0 0.0
    %174 = vmatprep.subr.mxu0 0.0
    %175 = vmatpush1.msra.mxu0 0.0
    %176 = vmatprep.subr.mxu0 0.0
    %177 = vmatpush1.msra.mxu0 0.0
    %178 = vmatprep.subr.mxu0 0.0
    %179 = vmatpush1.msra.mxu0 0.0
    %180 = vmatprep.subr.mxu0 0.0
    %181 = vmatpush1.msra.mxu0 0.0
    %182 = vmatprep.subr.mxu0 0.0
    %183 = vmatpush1.msra.mxu0 0.0
    %184 = vmatprep.subr.mxu0 0.0
    %185 = vmatpush1.msra.mxu0 0.0
    %186 = vmatprep.subr.mxu0 0.0
    %187 = vmatpush1.msra.mxu0 0.0
    %188 = vmatprep.subr.mxu0 0.0
    %189 = vmatpush1.msra.mxu0 0.0
    %190 = vmatprep.subr.mxu0 0.0
    %191 = vmatpush1.msra.mxu0 0.0
    %192 = vmatprep.subr.mxu0 0.0
    %193 = vmatpush1.msra.mxu0 0.0
    %194 = vmatprep.subr.mxu0 0.0
    %195 = vmatpush1.msra.mxu0 0.0
    %196 = vmatprep.subr.mxu0 0.0
    %197 = vmatpush1.msra.mxu0 0.0
    %198 = vmatprep.subr.mxu0 0.0
    %199 = vmatpush1.msra.mxu0 0.0
    %200 = vmatprep.subr.mxu0 0.0
    %201 = vmatpush1.msra.mxu0 0.0
    %202 = vmatprep.subr.mxu0 0.0
    %203 = vmatpush1.msra.mxu0 0.0
    %204 = vmatprep.subr.mxu0 0.0
    %205 = vmatpush1.msra.mxu0 0.0
    %206 = vmatprep.subr.mxu0 0.0
    %207 = vmatpush1.msra.mxu0 0.0
    %208 = vmatprep.subr.mxu0 0.0
    %209 = vmatpush1.msra.mxu0 0.0
    %210 = vmatprep.subr.mxu0 0.0
    %211 = vmatpush1.msra.mxu0 0.0
    %212 = vmatprep.subr.mxu0 0.0
    %213 = vmatpush1.msra.mxu0 0.0
    %214 = vmatprep.subr.mxu0 0.0
    %215 = vmatpush1.msra.mxu0 0.0
    %216 = vmatprep.subr.mxu0 0.0
    %217 = vmatpush1.msra.mxu0 0.0
    %218 = vmatprep.subr.mxu0 0.0
    %219 = vmatpush1.msra.mxu0 0.0
    %220 = vmatprep.subr.mxu0 0.0
    %221 = vmatpush1.msra.mxu0 0.0
    %222 = vmatprep.subr.mxu0 0.0
    %223 = vmatpush1.msra.mxu0 0.0
    %224 = vmatprep.mubr.f32.mxu0 0.0
    %225 = vmatmul.mubr.f32.gmra.mrb[0].mxu0 %v65
    %v226 = vpop.f32.mrb[0].mxu0
    %v227 = vadd.f32 %v61, %v226
    %v228 = vpop.f32.mrb[0].mxu0
    %229 = vmatprep.mubr.f32.mxu0 0.0
    %230 = vmatmul.mubr.f32.gmra.mrb[0].mxu0 %v68
    %v231 = vpop.f32.mrb[0].mxu0
    %v232 = vadd.f32 %v61, %v231
    %v233 = vpop.f32.mrb[0].mxu0
    %234 = vmatprep.mubr.f32.mxu0 0.0
    %235 = vmatmul.mubr.f32.gmra.mrb[0].mxu0 %v71
    %v236 = vpop.f32.mrb[0].mxu0
    %v237 = vadd.f32 %v61, %v236
    %v238 = vpop.f32.mrb[0].mxu0
    %239 = vmatprep.mubr.f32.mxu0 0.0
    %240 = vmatmul.mubr.f32.gmra.mrb[0].mxu0 %v74
    %v241 = vpop.f32.mrb[0].mxu0
    %v242 = vadd.f32 %v61, %v241
    %v243 = vpop.f32.mrb[0].mxu0
    %244 = vmatprep.mubr.f32.mxu0 0.0
    %245 = vmatmul.mubr.f32.gmra.mrb[0].mxu0 %v77
    %v246 = vpop.f32.mrb[0].mxu0
    %v247 = vadd.f32 %v61, %v246
    %v248 = vpop.f32.mrb[0].mxu0
    %249 = vmatprep.mubr.f32.mxu0 0.0
    %250 = vmatmul.mubr.f32.gmra.mrb[0].mxu0 %v80
    %v251 = vpop.f32.mrb[0].mxu0
    %v252 = vadd.f32 %v61, %v251
    %v253 = vpop.f32.mrb[0].mxu0
    %254 = vmatprep.mubr.f32.mxu0 0.0
    %255 = vmatmul.mubr.f32.gmra.mrb[0].mxu0 %v83
    %v256 = vpop.f32.mrb[0].mxu0
    %v257 = vadd.f32 %v61, %v256
    %v258 = vpop.f32.mrb[0].mxu0
    %259 = vmatprep.mubr.f32.mxu0 0.0
    %260 = vmatmul.mubr.f32.gmra.mrb[0].mxu0 %v86
    %v261 = vpop.f32.mrb[0].mxu0
    %v262 = vadd.f32 %v61, %v261
    %v263 = vpop.f32.mrb[0].mxu0
    %264 = vmatprep.mubr.f32.mxu0 0.0
    %265 = vmatmul.mubr.f32.gmra.mrb[0].mxu0 %v89
    %v266 = vpop.f32.mrb[0].mxu0
    %v267 = vadd.f32 %v61, %v266
    %v268 = vpop.f32.mrb[0].mxu0
    %269 = vmatprep.mubr.f32.mxu0 0.0
    %270 = vmatmul.mubr.f32.gmra.mrb[0].mxu0 %v92
    %v271 = vpop.f32.mrb[0].mxu0
    %v272 = vadd.f32 %v61, %v271
    %v273 = vpop.f32.mrb[0].mxu0
    %274 = vmatprep.mubr.f32.mxu0 0.0
    %275 = vmatmul.mubr.f32.gmra.mrb[0].mxu0 %v95
    %v276 = vpop.f32.mrb[0].mxu0
    %v277 = vadd.f32 %v61, %v276
    %v278 = vpop.f32.mrb[0].mxu0
    %279 = vmatprep.mubr.f32.mxu0 0.0
    %280 = vmatmul.mubr.f32.gmra.mrb[0].mxu0 %v98
    %v281 = vpop.f32.mrb[0].mxu0
    %v282 = vadd.f32 %v61, %v281
    %v283 = vpop.f32.mrb[0].mxu0
    %284 = vmatprep.mubr.f32.mxu0 0.0
    %285 = vmatmul.mubr.f32.gmra.mrb[0].mxu0 %v101
    %v286 = vpop.f32.mrb[0].mxu0
    %v287 = vadd.f32 %v61, %v286
    %v288 = vpop.f32.mrb[0].mxu0
    %289 = vmatprep.mubr.f32.mxu0 0.0
    %290 = vmatmul.mubr.f32.gmra.mrb[0].mxu0 %v104
    %v291 = vpop.f32.mrb[0].mxu0
    %v292 = vadd.f32 %v61, %v291
    %v293 = vpop.f32.mrb[0].mxu0
    %294 = vmatprep.mubr.f32.mxu0 0.0
    %295 = vmatmul.mubr.f32.gmra.mrb[0].mxu0 %v107
    %v296 = vpop.f32.mrb[0].mxu0
    %v297 = vadd.f32 %v61, %v296
    %v298 = vpop.f32.mrb[0].mxu0
    %299 = vmatprep.mubr.f32.mxu0 0.0
    %300 = vmatmul.mubr.f32.gmra.mrb[0].mxu0 %v110
    %v301 = vpop.f32.mrb[0].mxu0
    %v302 = vadd.f32 %v61, %v301
    %v303 = vpop.f32.mrb[0].mxu0
    %304 = vmatprep.mubr.f32.mxu0 0.0
    %305 = vmatmul.mubr.f32.gmra.mrb[0].mxu0 %v113
    %v306 = vpop.f32.mrb[0].mxu0
    %v307 = vadd.f32 %v61, %v306
    %v308 = vpop.f32.mrb[0].mxu0
    %309 = vmatprep.mubr.f32.mxu0 0.0
    %310 = vmatmul.mubr.f32.gmra.mrb[0].mxu0 %v116
    %v311 = vpop.f32.mrb[0].mxu0
    %v312 = vadd.f32 %v61, %v311
    %v313 = vpop.f32.mrb[0].mxu0
    %314 = vmatprep.mubr.f32.mxu0 0.0
    %315 = vmatmul.mubr.f32.gmra.mrb[0].mxu0 %v119
    %v316 = vpop.f32.mrb[0].mxu0
    %v317 = vadd.f32 %v61, %v316
    %v318 = vpop.f32.mrb[0].mxu0
    %319 = vmatprep.mubr.f32.mxu0 0.0
    %320 = vmatmul.mubr.f32.gmra.mrb[0].mxu0 %v122
    %v321 = vpop.f32.mrb[0].mxu0
    %v322 = vadd.f32 %v61, %v321
    %v323 = vpop.f32.mrb[0].mxu0
    %324 = vmatprep.mubr.f32.mxu0 0.0
    %325 = vmatmul.mubr.f32.gmra.mrb[0].mxu0 %v125
    %v326 = vpop.f32.mrb[0].mxu0
    %v327 = vadd.f32 %v61, %v326
    %v328 = vpop.f32.mrb[0].mxu0
    %329 = vmatprep.mubr.f32.mxu0 0.0
    %330 = vmatmul.mubr.f32.gmra.mrb[0].mxu0 %v128
    %v331 = vpop.f32.mrb[0].mxu0
    %v332 = vadd.f32 %v61, %v331
    %v333 = vpop.f32.mrb[0].mxu0
    %334 = vmatprep.mubr.f32.mxu0 0.0
    %335 = vmatmul.mubr.f32.gmra.mrb[0].mxu0 %v131
    %v336 = vpop.f32.mrb[0].mxu0
    %v337 = vadd.f32 %v61, %v336
    %v338 = vpop.f32.mrb[0].mxu0
    %339 = vmatprep.mubr.f32.mxu0 0.0
    %340 = vmatmul.mubr.f32.gmra.mrb[0].mxu0 %v134
    %v341 = vpop.f32.mrb[0].mxu0
    %v342 = vadd.f32 %v61, %v341
    %v343 = vpop.f32.mrb[0].mxu0
    %344 = vmatprep.mubr.f32.mxu0 0.0
    %345 = vmatmul.mubr.f32.gmra.mrb[0].mxu0 %v137
    %v346 = vpop.f32.mrb[0].mxu0
    %v347 = vadd.f32 %v61, %v346
    %v348 = vpop.f32.mrb[0].mxu0
    %349 = vmatprep.mubr.f32.mxu0 0.0
    %350 = vmatmul.mubr.f32.gmra.mrb[0].mxu0 %v140
    %v351 = vpop.f32.mrb[0].mxu0
    %v352 = vadd.f32 %v61, %v351
    %v353 = vpop.f32.mrb[0].mxu0
    %354 = vmatprep.mubr.f32.mxu0 0.0
    %355 = vmatmul.mubr.f32.gmra.mrb[0].mxu0 %v143
    %v356 = vpop.f32.mrb[0].mxu0
    %v357 = vadd.f32 %v61, %v356
    %v358 = vpop.f32.mrb[0].mxu0
    %359 = vmatprep.mubr.f32.mxu0 0.0
    %360 = vmatmul.mubr.f32.gmra.mrb[0].mxu0 %v146
    %v361 = vpop.f32.mrb[0].mxu0
    %v362 = vadd.f32 %v61, %v361
    %v363 = vpop.f32.mrb[0].mxu0
    %364 = vmatprep.mubr.f32.mxu0 0.0
    %365 = vmatmul.mubr.f32.gmra.mrb[0].mxu0 %v149
    %v366 = vpop.f32.mrb[0].mxu0
    %v367 = vadd.f32 %v61, %v366
    %v368 = vpop.f32.mrb[0].mxu0
    %369 = vmatprep.mubr.f32.mxu0 0.0
    %370 = vmatmul.mubr.f32.gmra.mrb[0].mxu0 %v152
    %v371 = vpop.f32.mrb[0].mxu0
    %v372 = vadd.f32 %v61, %v371
    %v373 = vpop.f32.mrb[0].mxu0
    %374 = vmatprep.mubr.f32.mxu0 0.0
    %375 = vmatmul.mubr.f32.gmra.mrb[0].mxu0 %v155
    %v376 = vpop.f32.mrb[0].mxu0
    %v377 = vadd.f32 %v61, %v376
    %v378 = vpop.f32.mrb[0].mxu0
    %379 = vmatprep.mubr.f32.mxu0 0.0
    %380 = vmatmul.mubr.f32.gmra.mrb[0].mxu0 %v158
    %v381 = vpop.f32.mrb[0].mxu0
    %v382 = vadd.f32 %v61, %v381
    %v383 = vpop.f32.mrb[0].mxu0
    %384 = vdwg.mxu0
    %v385 = vmax.f32 %v227, 0.0
    %v386 = vmax.f32 %v232, 0.0
    %v387 = vmax.f32 %v237, 0.0
    %v388 = vmax.f32 %v242, 0.0
    %v389 = vmax.f32 %v247, 0.0
    %v390 = vmax.f32 %v252, 0.0
    %v391 = vmax.f32 %v257, 0.0
    %v392 = vmax.f32 %v262, 0.0
    %v393 = vmax.f32 %v267, 0.0
    %v394 = vmax.f32 %v272, 0.0
    %v395 = vmax.f32 %v277, 0.0
    %v396 = vmax.f32 %v282, 0.0
    %v397 = vmax.f32 %v287, 0.0
    %v398 = vmax.f32 %v292, 0.0
    %v399 = vmax.f32 %v297, 0.0
    %v400 = vmax.f32 %v302, 0.0
    %v401 = vmax.f32 %v307, 0.0
    %v402 = vmax.f32 %v312, 0.0
    %v403 = vmax.f32 %v317, 0.0
    %v404 = vmax.f32 %v322, 0.0
    %v405 = vmax.f32 %v327, 0.0
    %v406 = vmax.f32 %v332, 0.0
    %v407 = vmax.f32 %v337, 0.0
    %v408 = vmax.f32 %v342, 0.0
    %v409 = vmax.f32 %v347, 0.0
    %v410 = vmax.f32 %v352, 0.0
    %v411 = vmax.f32 %v357, 0.0
    %v412 = vmax.f32 %v362, 0.0
    %v413 = vmax.f32 %v367, 0.0
    %v414 = vmax.f32 %v372, 0.0
    %v415 = vmax.f32 %v377, 0.0
    %v416 = vmax.f32 %v382, 0.0
    %v417 = vld [vmem:[%s3] sm:$0x1]
    %v419 = vlaneseq
    %v420 = vshrl.u32 %v419, 7
    %v421 = vsub.s32 0, %v420
    %v422 = vrot.slane %v417, %v421
    %v424 = vmul.f32 %v385, %v422
    %v425 = vmul.f32 %v386, %v422
    %v426 = vmul.f32 %v387, %v422
    %v427 = vmul.f32 %v388, %v422
    %v428 = vmul.f32 %v389, %v422
    %v429 = vmul.f32 %v390, %v422
    %v430 = vmul.f32 %v391, %v422
    %v431 = vmul.f32 %v392, %v422
    %v432 = vmul.f32 %v393, %v422
    %v433 = vmul.f32 %v394, %v422
    %v434 = vmul.f32 %v395, %v422
    %v435 = vmul.f32 %v396, %v422
    %v436 = vmul.f32 %v397, %v422
    %v437 = vmul.f32 %v398, %v422
    %v438 = vmul.f32 %v399, %v422
    %v439 = vmul.f32 %v400, %v422
    %v440 = vmul.f32 %v401, %v422
    %v441 = vmul.f32 %v402, %v422
    %v442 = vmul.f32 %v403, %v422
    %v443 = vmul.f32 %v404, %v422
    %v444 = vmul.f32 %v405, %v422
    %v445 = vmul.f32 %v406, %v422
    %v446 = vmul.f32 %v407, %v422
    %v447 = vmul.f32 %v408, %v422
    %v448 = vmul.f32 %v409, %v422
    %v449 = vmul.f32 %v410, %v422
    %v450 = vmul.f32 %v411, %v422
    %v451 = vmul.f32 %v412, %v422
    %v452 = vmul.f32 %v413, %v422
    %v453 = vmul.f32 %v414, %v422
    %v454 = vmul.f32 %v415, %v422
    %v455 = vmul.f32 %v416, %v422
    %vm456 = vcmask 261120
    %v457 = vsel %vm456, %v424, 0.0
    %458 = vadd.xlane.f32.xlu0 %v457
    %v459 = vpop.xlane.xlu0 %458
    %v460 = vsel %vm456, %v425, 0.0
    %461 = vadd.xlane.f32.xlu0 %v460
    %v462 = vpop.xlane.xlu0 %461
    %v463 = vsel %vm456, %v426, 0.0
    %464 = vadd.xlane.f32.xlu0 %v463
    %v465 = vpop.xlane.xlu0 %464
    %v466 = vsel %vm456, %v427, 0.0
    %467 = vadd.xlane.f32.xlu0 %v466
    %v468 = vpop.xlane.xlu0 %467
    %v469 = vsel %vm456, %v428, 0.0
    %470 = vadd.xlane.f32.xlu0 %v469
    %v471 = vpop.xlane.xlu0 %470
    %v472 = vsel %vm456, %v429, 0.0
    %473 = vadd.xlane.f32.xlu0 %v472
    %v474 = vpop.xlane.xlu0 %473
    %v475 = vsel %vm456, %v430, 0.0
    %476 = vadd.xlane.f32.xlu0 %v475
    %v477 = vpop.xlane.xlu0 %476
    %v478 = vsel %vm456, %v431, 0.0
    %479 = vadd.xlane.f32.xlu0 %v478
    %v480 = vpop.xlane.xlu0 %479
    %v481 = vsel %vm456, %v432, 0.0
    %482 = vadd.xlane.f32.xlu0 %v481
    %v483 = vpop.xlane.xlu0 %482
    %v484 = vsel %vm456, %v433, 0.0
    %485 = vadd.xlane.f32.xlu0 %v484
    %v486 = vpop.xlane.xlu0 %485
    %v487 = vsel %vm456, %v434, 0.0
    %488 = vadd.xlane.f32.xlu0 %v487
    %v489 = vpop.xlane.xlu0 %488
    %v490 = vsel %vm456, %v435, 0.0
    %491 = vadd.xlane.f32.xlu0 %v490
    %v492 = vpop.xlane.xlu0 %491
    %v493 = vsel %vm456, %v436, 0.0
    %494 = vadd.xlane.f32.xlu0 %v493
    %v495 = vpop.xlane.xlu0 %494
    %v496 = vsel %vm456, %v437, 0.0
    %497 = vadd.xlane.f32.xlu0 %v496
    %v498 = vpop.xlane.xlu0 %497
    %v499 = vsel %vm456, %v438, 0.0
    %500 = vadd.xlane.f32.xlu0 %v499
    %v501 = vpop.xlane.xlu0 %500
    %v502 = vsel %vm456, %v439, 0.0
    %503 = vadd.xlane.f32.xlu0 %v502
    %v504 = vpop.xlane.xlu0 %503
    %v505 = vsel %vm456, %v440, 0.0
    %506 = vadd.xlane.f32.xlu0 %v505
    %v507 = vpop.xlane.xlu0 %506
    %v508 = vsel %vm456, %v441, 0.0
    %509 = vadd.xlane.f32.xlu0 %v508
    %v510 = vpop.xlane.xlu0 %509
    %v511 = vsel %vm456, %v442, 0.0
    %512 = vadd.xlane.f32.xlu0 %v511
    %v513 = vpop.xlane.xlu0 %512
    %v514 = vsel %vm456, %v443, 0.0
    %515 = vadd.xlane.f32.xlu0 %v514
    %v516 = vpop.xlane.xlu0 %515
    %v517 = vsel %vm456, %v444, 0.0
    %518 = vadd.xlane.f32.xlu0 %v517
    %v519 = vpop.xlane.xlu0 %518
    %v520 = vsel %vm456, %v445, 0.0
    %521 = vadd.xlane.f32.xlu0 %v520
    %v522 = vpop.xlane.xlu0 %521
    %v523 = vsel %vm456, %v446, 0.0
    %524 = vadd.xlane.f32.xlu0 %v523
    %v525 = vpop.xlane.xlu0 %524
    %v526 = vsel %vm456, %v447, 0.0
    %527 = vadd.xlane.f32.xlu0 %v526
    %v528 = vpop.xlane.xlu0 %527
    %v529 = vsel %vm456, %v448, 0.0
    %530 = vadd.xlane.f32.xlu0 %v529
    %v531 = vpop.xlane.xlu0 %530
    %v532 = vsel %vm456, %v449, 0.0
    %533 = vadd.xlane.f32.xlu0 %v532
    %v534 = vpop.xlane.xlu0 %533
    %v535 = vsel %vm456, %v450, 0.0
    %536 = vadd.xlane.f32.xlu0 %v535
    %v537 = vpop.xlane.xlu0 %536
    %v538 = vsel %vm456, %v451, 0.0
    %539 = vadd.xlane.f32.xlu0 %v538
    %v540 = vpop.xlane.xlu0 %539
    %v541 = vsel %vm456, %v452, 0.0
    %542 = vadd.xlane.f32.xlu0 %v541
    %v543 = vpop.xlane.xlu0 %542
    %v544 = vsel %vm456, %v453, 0.0
    %545 = vadd.xlane.f32.xlu0 %v544
    %v546 = vpop.xlane.xlu0 %545
    %v547 = vsel %vm456, %v454, 0.0
    %548 = vadd.xlane.f32.xlu0 %v547
    %v549 = vpop.xlane.xlu0 %548
    %v550 = vsel %vm456, %v455, 0.0
    %551 = vadd.xlane.f32.xlu0 %v550
    %v552 = vpop.xlane.xlu0 %551
    %s553 = sld [smem:[#allocation2]]
    %v554 = vstv %s553
    %v555 = vadd.f32 %v459, %v554
    %v556 = vadd.f32 %v462, %v554
    %v557 = vadd.f32 %v465, %v554
    %v558 = vadd.f32 %v468, %v554
    %v559 = vadd.f32 %v471, %v554
    %v560 = vadd.f32 %v474, %v554
    %v561 = vadd.f32 %v477, %v554
    %v562 = vadd.f32 %v480, %v554
    %v563 = vadd.f32 %v483, %v554
    %v564 = vadd.f32 %v486, %v554
    %v565 = vadd.f32 %v489, %v554
    %v566 = vadd.f32 %v492, %v554
    %v567 = vadd.f32 %v495, %v554
    %v568 = vadd.f32 %v498, %v554
    %v569 = vadd.f32 %v501, %v554
    %v570 = vadd.f32 %v504, %v554
    %v571 = vadd.f32 %v507, %v554
    %v572 = vadd.f32 %v510, %v554
    %v573 = vadd.f32 %v513, %v554
    %v574 = vadd.f32 %v516, %v554
    %v575 = vadd.f32 %v519, %v554
    %v576 = vadd.f32 %v522, %v554
    %v577 = vadd.f32 %v525, %v554
    %v578 = vadd.f32 %v528, %v554
    %v579 = vadd.f32 %v531, %v554
    %v580 = vadd.f32 %v534, %v554
    %v581 = vadd.f32 %v537, %v554
    %v582 = vadd.f32 %v540, %v554
    %v583 = vadd.f32 %v543, %v554
    %v584 = vadd.f32 %v546, %v554
    %v585 = vadd.f32 %v549, %v554
    %v586 = vadd.f32 %v552, %v554
    %v619 = vlaneseq
    %v620 = vand.u32 %v619, 127
    %v621 = vlaneseq
    %v622 = vshrl.u32 %v621, 7
    %v623 = vsub.s32 %v620, %v622
    %v624 = vrot.slane %v555, %v623
    %v625 = vadd.s32 %v620, 4294967288
    %v626 = vlaneseq
    %v627 = vshrl.u32 %v626, 7
    %v628 = vsub.s32 %v625, %v627
    %v629 = vrot.slane %v556, %v628
    %vm630 = vcmask 130112
    %v631 = vsel %vm630, %v629, %v624
    %v632 = vadd.s32 %v620, 4294967280
    %v633 = vlaneseq
    %v634 = vshrl.u32 %v633, 7
    %v635 = vsub.s32 %v632, %v634
    %v636 = vrot.slane %v557, %v635
    %vm637 = vcmask 195712
    %v638 = vsel %vm637, %v636, %v631
    %v639 = vadd.s32 %v620, 4294967272
    %v640 = vlaneseq
    %v641 = vshrl.u32 %v640, 7
    %v642 = vsub.s32 %v639, %v641
    %v643 = vrot.slane %v558, %v642
    %vm644 = vcmask 261312
    %v645 = vsel %vm644, %v643, %v638
    %v646 = vadd.s32 %v620, 4294967264
    %v647 = vlaneseq
    %v648 = vshrl.u32 %v647, 7
    %v649 = vsub.s32 %v646, %v648
    %v650 = vrot.slane %v559, %v649
    %vm651 = vcmask 326912
    %v652 = vsel %vm651, %v650, %v645
    %v653 = vadd.s32 %v620, 4294967256
    %v654 = vlaneseq
    %v655 = vshrl.u32 %v654, 7
    %v656 = vsub.s32 %v653, %v655
    %v657 = vrot.slane %v560, %v656
    %vm658 = vcmask 392512
    %v659 = vsel %vm658, %v657, %v652
    %v660 = vadd.s32 %v620, 4294967248
    %v661 = vlaneseq
    %v662 = vshrl.u32 %v661, 7
    %v663 = vsub.s32 %v660, %v662
    %v664 = vrot.slane %v561, %v663
    %vm665 = vcmask 458112
    %v666 = vsel %vm665, %v664, %v659
    %v667 = vadd.s32 %v620, 4294967240
    %v668 = vlaneseq
    %v669 = vshrl.u32 %v668, 7
    %v670 = vsub.s32 %v667, %v669
    %v671 = vrot.slane %v562, %v670
    %vm672 = vcmask 523712
    %v673 = vsel %vm672, %v671, %v666
    %v674 = vadd.s32 %v620, 4294967232
    %v675 = vlaneseq
    %v676 = vshrl.u32 %v675, 7
    %v677 = vsub.s32 %v674, %v676
    %v678 = vrot.slane %v563, %v677
    %vm679 = vcmask 589312
    %v680 = vsel %vm679, %v678, %v673
    %v681 = vadd.s32 %v620, 4294967224
    %v682 = vlaneseq
    %v683 = vshrl.u32 %v682, 7
    %v684 = vsub.s32 %v681, %v683
    %v685 = vrot.slane %v564, %v684
    %vm686 = vcmask 654912
    %v687 = vsel %vm686, %v685, %v680
    %v688 = vadd.s32 %v620, 4294967216
    %v689 = vlaneseq
    %v690 = vshrl.u32 %v689, 7
    %v691 = vsub.s32 %v688, %v690
    %v692 = vrot.slane %v565, %v691
    %vm693 = vcmask 720512
    %v694 = vsel %vm693, %v692, %v687
    %v695 = vadd.s32 %v620, 4294967208
    %v696 = vlaneseq
    %v697 = vshrl.u32 %v696, 7
    %v698 = vsub.s32 %v695, %v697
    %v699 = vrot.slane %v566, %v698
    %vm700 = vcmask 786112
    %v701 = vsel %vm700, %v699, %v694
    %v702 = vadd.s32 %v620, 4294967200
    %v703 = vlaneseq
    %v704 = vshrl.u32 %v703, 7
    %v705 = vsub.s32 %v702, %v704
    %v706 = vrot.slane %v567, %v705
    %vm707 = vcmask 851712
    %v708 = vsel %vm707, %v706, %v701
    %v709 = vadd.s32 %v620, 4294967192
    %v710 = vlaneseq
    %v711 = vshrl.u32 %v710, 7
    %v712 = vsub.s32 %v709, %v711
    %v713 = vrot.slane %v568, %v712
    %vm714 = vcmask 917312
    %v715 = vsel %vm714, %v713, %v708
    %v716 = vadd.s32 %v620, 4294967184
    %v717 = vlaneseq
    %v718 = vshrl.u32 %v717, 7
    %v719 = vsub.s32 %v716, %v718
    %v720 = vrot.slane %v569, %v719
    %vm721 = vcmask 982912
    %v722 = vsel %vm721, %v720, %v715
    %v723 = vadd.s32 %v620, 4294967176
    %v724 = vlaneseq
    %v725 = vshrl.u32 %v724, 7
    %v726 = vsub.s32 %v723, %v725
    %v727 = vrot.slane %v570, %v726
    %vm728 = vcmask 1048512
    %v729 = vsel %vm728, %v727, %v722
    %v730 = vlaneseq
    %v731 = vshrl.u32 %v730, 7
    %v732 = vsub.s32 %v620, %v731
    %v733 = vrot.slane %v571, %v732
    %v734 = vlaneseq
    %v735 = vshrl.u32 %v734, 7
    %v736 = vsub.s32 %v625, %v735
    %v737 = vrot.slane %v572, %v736
    %v738 = vsel %vm630, %v737, %v733
    %v739 = vlaneseq
    %v740 = vshrl.u32 %v739, 7
    %v741 = vsub.s32 %v632, %v740
    %v742 = vrot.slane %v573, %v741
    %v743 = vsel %vm637, %v742, %v738
    %v744 = vlaneseq
    %v745 = vshrl.u32 %v744, 7
    %v746 = vsub.s32 %v639, %v745
    %v747 = vrot.slane %v574, %v746
    %v748 = vsel %vm644, %v747, %v743
    %v749 = vlaneseq
    %v750 = vshrl.u32 %v749, 7
    %v751 = vsub.s32 %v646, %v750
    %v752 = vrot.slane %v575, %v751
    %v753 = vsel %vm651, %v752, %v748
    %v754 = vlaneseq
    %v755 = vshrl.u32 %v754, 7
    %v756 = vsub.s32 %v653, %v755
    %v757 = vrot.slane %v576, %v756
    %v758 = vsel %vm658, %v757, %v753
    %v759 = vlaneseq
    %v760 = vshrl.u32 %v759, 7
    %v761 = vsub.s32 %v660, %v760
    %v762 = vrot.slane %v577, %v761
    %v763 = vsel %vm665, %v762, %v758
    %v764 = vlaneseq
    %v765 = vshrl.u32 %v764, 7
    %v766 = vsub.s32 %v667, %v765
    %v767 = vrot.slane %v578, %v766
    %v768 = vsel %vm672, %v767, %v763
    %v769 = vlaneseq
    %v770 = vshrl.u32 %v769, 7
    %v771 = vsub.s32 %v674, %v770
    %v772 = vrot.slane %v579, %v771
    %v773 = vsel %vm679, %v772, %v768
    %v774 = vlaneseq
    %v775 = vshrl.u32 %v774, 7
    %v776 = vsub.s32 %v681, %v775
    %v777 = vrot.slane %v580, %v776
    %v778 = vsel %vm686, %v777, %v773
    %v779 = vlaneseq
    %v780 = vshrl.u32 %v779, 7
    %v781 = vsub.s32 %v688, %v780
    %v782 = vrot.slane %v581, %v781
    %v783 = vsel %vm693, %v782, %v778
    %v784 = vlaneseq
    %v785 = vshrl.u32 %v784, 7
    %v786 = vsub.s32 %v695, %v785
    %v787 = vrot.slane %v582, %v786
    %v788 = vsel %vm700, %v787, %v783
    %v789 = vlaneseq
    %v790 = vshrl.u32 %v789, 7
    %v791 = vsub.s32 %v702, %v790
    %v792 = vrot.slane %v583, %v791
    %v793 = vsel %vm707, %v792, %v788
    %v794 = vlaneseq
    %v795 = vshrl.u32 %v794, 7
    %v796 = vsub.s32 %v709, %v795
    %v797 = vrot.slane %v584, %v796
    %v798 = vsel %vm714, %v797, %v793
    %v799 = vlaneseq
    %v800 = vshrl.u32 %v799, 7
    %v801 = vsub.s32 %v716, %v800
    %v802 = vrot.slane %v585, %v801
    %v803 = vsel %vm721, %v802, %v798
    %v804 = vlaneseq
    %v805 = vshrl.u32 %v804, 7
    %v806 = vsub.s32 %v723, %v805
    %v807 = vrot.slane %v586, %v806
    %v808 = vsel %vm728, %v807, %v803
    %vm809 = vcmask 1041409
    %v810 = vsel %vm809, %v808, %v729
    %812 = vst [vmem:[#allocation3] sm:$0x3] %v810
    // Predicated region
    $region22: #{tpu_custom_call.1} parent=1 // pred_check
      _
    $region23: #{tpu_custom_call.1} parent=1 // pred_check_branch
      %814 = sbr.rel (0) target = $region25
    $region24: #{tpu_custom_call.1} parent=1 // pred_region
      %s816 = ssub.s32 32, 32
      %817 = vsyncadd [#allocation4], %s816
      %s819 = sshll.u32 [#allocation3], 4
      %s820 = int_to_ptr.vmem [resolvable:$true] %s819
      %822 = dma.vmem_to_hbm [thread:$0]  %s820, 32, %s5, [#allocation4]
    $region25: #{tpu_custom_call.1} parent=1 // pred_fallthru
      _
    // Predicated region
    $region26: #{tpu_custom_call.1} parent=1 // pred_check
      _
    $region27: #{tpu_custom_call.1} parent=1 // pred_check_branch
      %824 = sbr.rel (0) target = $region29
    $region28: #{tpu_custom_call.1} parent=1 // pred_region
      %825 = dma.done [#allocation4], 32
    $region29: #{tpu_custom_call.1} parent=1 // pred_fallthru
      _
    %826 = vsyncpa [#allocation4], 1

// kernel: tpu_custom_call.1
$region0: #{tpu_custom_call.1}
  #allocation0 [shape = 'u32[]', space=smem, size = 0x4, offset = 0x4, fixed_abs, tag = 'smem constant byte address 0x4 - core index']
  #allocation1 [shape = 'u32[144,128]{1,0:T(1,128)}', space=vmem, size = 0x12000, scoped, tag = 'internal scratch']
  #allocation2 [shape = 'f32[1,1]{1,0:T(1,128)S(6)}', space=smem, size = 0x200, scoped, tag = 'scoped memory for tpu_custom_call.1']
  %s0 = inlined_call_operand.vmem [shape: f32[256,16], index: 0, kind: input, shape index: {}]
  %s1 = inlined_call_operand.vmem [shape: f32[16,32], index: 1, kind: input, shape index: {}]
  %s2 = inlined_call_operand.vmem [shape: f32[1,32], index: 2, kind: input, shape index: {}]
  %s3 = inlined_call_operand.vmem [shape: f32[1,32], index: 3, kind: input, shape index: {}]
  %s4 = inlined_call_operand.<no memory space> [shape: f32[1,1], index: 4, kind: input, shape index: {}]
  %s5 = inlined_call_operand.vmem [shape: f32[256,1], index: 5, kind: output, shape index: {}]
  %s6 = sld [smem:[#allocation0]]
  $region30: #{tpu_custom_call.1} parent=0
    _
  %s8 = ssub.s32 1, %s6
  %s9 = scalar_select 0, %s8, %s6
  %10 = sst [smem:[#allocation2]] %s4
  // Predicated region
  $region2: #{tpu_custom_call.1} parent=0 // pred_check
    _
  $region3: #{tpu_custom_call.1} parent=0 // pred_check_branch
    %12 = sbr.rel (0) target = $region5
  $region4: #{tpu_custom_call.1} parent=0 // pred_region
    _
  $region5: #{tpu_custom_call.1} parent=0 // pred_fallthru
    _
  // Predicated region
  $region6: #{tpu_custom_call.1} parent=0 // pred_check
    _
  $region7: #{tpu_custom_call.1} parent=0 // pred_check_branch
    %14 = sbr.rel (0) target = $region9
  $region8: #{tpu_custom_call.1} parent=0 // pred_region
    _
  $region9: #{tpu_custom_call.1} parent=0 // pred_fallthru
    _
  // Predicated region
  $region10: #{tpu_custom_call.1} parent=0 // pred_check
    _
  $region11: #{tpu_custom_call.1} parent=0 // pred_check_branch
    %16 = sbr.rel (0) target = $region13
  $region12: #{tpu_custom_call.1} parent=0 // pred_region
    _
  $region13: #{tpu_custom_call.1} parent=0 // pred_fallthru
    _
  // Predicated region
  $region14: #{tpu_custom_call.1} parent=0 // pred_check
    _
  $region15: #{tpu_custom_call.1} parent=0 // pred_check_branch
    %18 = sbr.rel (0) target = $region17
  $region16: #{tpu_custom_call.1} parent=0 // pred_region
    _
  $region17: #{tpu_custom_call.1} parent=0 // pred_fallthru
    _
  // Predicated region
  $region18: #{tpu_custom_call.1} parent=0 // pred_check
    _
  $region19: #{tpu_custom_call.1} parent=0 // pred_check_branch
    %20 = sbr.rel (0) target = $region21
  $region20: #{tpu_custom_call.1} parent=0 // pred_region
    _
  $region21: #{tpu_custom_call.1} parent=0 // pred_fallthru
    _
  %v21 = vld [vmem:[%s0] sm:$0xff]
  %v22 = vld [vmem:[%s0 + $0x8] sm:$0xff]
  %v23 = vld [vmem:[%s0 + $0x10] sm:$0xff]
  %v24 = vld [vmem:[%s0 + $0x18] sm:$0xff]
  %v25 = vld [vmem:[%s0 + $0x20] sm:$0xff]
  %v26 = vld [vmem:[%s0 + $0x28] sm:$0xff]
  %v27 = vld [vmem:[%s0 + $0x30] sm:$0xff]
  %v28 = vld [vmem:[%s0 + $0x38] sm:$0xff]
  %v29 = vld [vmem:[%s0 + $0x40] sm:$0xff]
  %v30 = vld [vmem:[%s0 + $0x48] sm:$0xff]
  %v31 = vld [vmem:[%s0 + $0x50] sm:$0xff]
  %v32 = vld [vmem:[%s0 + $0x58] sm:$0xff]
  %v33 = vld [vmem:[%s0 + $0x60] sm:$0xff]
  %v34 = vld [vmem:[%s0 + $0x68] sm:$0xff]
  %v35 = vld [vmem:[%s0 + $0x70] sm:$0xff]
  %v36 = vld [vmem:[%s0 + $0x78] sm:$0xff]
  %v37 = vld [vmem:[%s0 + $0x80] sm:$0xff]
  %v38 = vld [vmem:[%s0 + $0x88] sm:$0xff]
  %v39 = vld [vmem:[%s0 + $0x90] sm:$0xff]
  %v40 = vld [vmem:[%s0 + $0x98] sm:$0xff]
  %v41 = vld [vmem:[%s0 + $0xa0] sm:$0xff]
  %v42 = vld [vmem:[%s0 + $0xa8] sm:$0xff]
  %v43 = vld [vmem:[%s0 + $0xb0] sm:$0xff]
  %v44 = vld [vmem:[%s0 + $0xb8] sm:$0xff]
  %v45 = vld [vmem:[%s0 + $0xc0] sm:$0xff]
  %v46 = vld [vmem:[%s0 + $0xc8] sm:$0xff]
  %v47 = vld [vmem:[%s0 + $0xd0] sm:$0xff]
  %v48 = vld [vmem:[%s0 + $0xd8] sm:$0xff]
  %v49 = vld [vmem:[%s0 + $0xe0] sm:$0xff]
  %v50 = vld [vmem:[%s0 + $0xe8] sm:$0xff]
  %v51 = vld [vmem:[%s0 + $0xf0] sm:$0xff]
  %v52 = vld [vmem:[%s0 + $0xf8] sm:$0xff]
  %v53 = vld [vmem:[%s1] sm:$0xff]
  %v54 = vld [vmem:[%s1 + $0x8] sm:$0xff]
  %v55 = vld [vmem:[%s2] sm:$0x1]
  %v57 = vlaneseq
  %v58 = vshrl.u32 %v57, 7
  %v59 = vsub.s32 0, %v58
  %v60 = vrot.slane %v55, %v59
  %vm62 = vcmask 130048
  %v64 = vsel %vm62, %v21, 0
  %v67 = vsel %vm62, %v22, 0
  %v70 = vsel %vm62, %v23, 0
  %v73 = vsel %vm62, %v24, 0
  %v76 = vsel %vm62, %v25, 0
  %v79 = vsel %vm62, %v26, 0
  %v82 = vsel %vm62, %v27, 0
  %v85 = vsel %vm62, %v28, 0
  %v88 = vsel %vm62, %v29, 0
  %v91 = vsel %vm62, %v30, 0
  %v94 = vsel %vm62, %v31, 0
  %v97 = vsel %vm62, %v32, 0
  %v100 = vsel %vm62, %v33, 0
  %v103 = vsel %vm62, %v34, 0
  %v106 = vsel %vm62, %v35, 0
  %v109 = vsel %vm62, %v36, 0
  %v112 = vsel %vm62, %v37, 0
  %v115 = vsel %vm62, %v38, 0
  %v118 = vsel %vm62, %v39, 0
  %v121 = vsel %vm62, %v40, 0
  %v124 = vsel %vm62, %v41, 0
  %v127 = vsel %vm62, %v42, 0
  %v130 = vsel %vm62, %v43, 0
  %v133 = vsel %vm62, %v44, 0
  %v136 = vsel %vm62, %v45, 0
  %v139 = vsel %vm62, %v46, 0
  %v142 = vsel %vm62, %v47, 0
  %v145 = vsel %vm62, %v48, 0
  %v148 = vsel %vm62, %v49, 0
  %v151 = vsel %vm62, %v50, 0
  %v154 = vsel %vm62, %v51, 0
  %v157 = vsel %vm62, %v52, 0
  %159 = vmatprep.subr.mxu0 0.0
  %160 = vmatpush1.msra.mxu0 %v53
  %161 = vmatprep.subr.mxu0 0.0
  %162 = vmatpush1.msra.mxu0 %v54
  %163 = vmatprep.subr.mxu0 0.0
  %164 = vmatpush1.msra.mxu0 0.0
  %165 = vmatprep.subr.mxu0 0.0
  %166 = vmatpush1.msra.mxu0 0.0
  %167 = vmatprep.subr.mxu0 0.0
  %168 = vmatpush1.msra.mxu0 0.0
  %169 = vmatprep.subr.mxu0 0.0
  %170 = vmatpush1.msra.mxu0 0.0
  %171 = vmatprep.subr.mxu0 0.0
  %172 = vmatpush1.msra.mxu0 0.0
  %173 = vmatprep.subr.mxu0 0.0
  %174 = vmatpush1.msra.mxu0 0.0
  %175 = vmatprep.subr.mxu0 0.0
  %176 = vmatpush1.msra.mxu0 0.0
  %177 = vmatprep.subr.mxu0 0.0
  %178 = vmatpush1.msra.mxu0 0.0
  %179 = vmatprep.subr.mxu0 0.0
  %180 = vmatpush1.msra.mxu0 0.0
  %181 = vmatprep.subr.mxu0 0.0
  %182 = vmatpush1.msra.mxu0 0.0
  %183 = vmatprep.subr.mxu0 0.0
  %184 = vmatpush1.msra.mxu0 0.0
  %185 = vmatprep.subr.mxu0 0.0
  %186 = vmatpush1.msra.mxu0 0.0
  %187 = vmatprep.subr.mxu0 0.0
  %188 = vmatpush1.msra.mxu0 0.0
  %189 = vmatprep.subr.mxu0 0.0
  %190 = vmatpush1.msra.mxu0 0.0
  %191 = vmatprep.subr.mxu0 0.0
  %192 = vmatpush1.msra.mxu0 0.0
  %193 = vmatprep.subr.mxu0 0.0
  %194 = vmatpush1.msra.mxu0 0.0
  %195 = vmatprep.subr.mxu0 0.0
  %196 = vmatpush1.msra.mxu0 0.0
  %197 = vmatprep.subr.mxu0 0.0
  %198 = vmatpush1.msra.mxu0 0.0
  %199 = vmatprep.subr.mxu0 0.0
  %200 = vmatpush1.msra.mxu0 0.0
  %201 = vmatprep.subr.mxu0 0.0
  %202 = vmatpush1.msra.mxu0 0.0
  %203 = vmatprep.subr.mxu0 0.0
  %204 = vmatpush1.msra.mxu0 0.0
  %205 = vmatprep.subr.mxu0 0.0
  %206 = vmatpush1.msra.mxu0 0.0
  %207 = vmatprep.subr.mxu0 0.0
  %208 = vmatpush1.msra.mxu0 0.0
  %209 = vmatprep.subr.mxu0 0.0
  %210 = vmatpush1.msra.mxu0 0.0
  %211 = vmatprep.subr.mxu0 0.0
  %212 = vmatpush1.msra.mxu0 0.0
  %213 = vmatprep.subr.mxu0 0.0
  %214 = vmatpush1.msra.mxu0 0.0
  %215 = vmatprep.subr.mxu0 0.0
  %216 = vmatpush1.msra.mxu0 0.0
  %217 = vmatprep.subr.mxu0 0.0
  %218 = vmatpush1.msra.mxu0 0.0
  %219 = vmatprep.subr.mxu0 0.0
  %220 = vmatpush1.msra.mxu0 0.0
  %221 = vmatprep.subr.mxu0 0.0
  %222 = vmatpush1.msra.mxu0 0.0
  %223 = vmatprep.mubr.f32.mxu0 0.0
  %224 = vmatmul.mubr.f32.gmra.mrb[0].mxu0 %v64
  %v225 = vpop.f32.mrb[0].mxu0
  %v226 = vadd.f32 %v60, %v225
  %v227 = vpop.f32.mrb[0].mxu0
  %228 = vmatprep.mubr.f32.mxu0 0.0
  %229 = vmatmul.mubr.f32.gmra.mrb[0].mxu0 %v67
  %v230 = vpop.f32.mrb[0].mxu0
  %v231 = vadd.f32 %v60, %v230
  %v232 = vpop.f32.mrb[0].mxu0
  %233 = vmatprep.mubr.f32.mxu0 0.0
  %234 = vmatmul.mubr.f32.gmra.mrb[0].mxu0 %v70
  %v235 = vpop.f32.mrb[0].mxu0
  %v236 = vadd.f32 %v60, %v235
  %v237 = vpop.f32.mrb[0].mxu0
  %238 = vmatprep.mubr.f32.mxu0 0.0
  %239 = vmatmul.mubr.f32.gmra.mrb[0].mxu0 %v73
  %v240 = vpop.f32.mrb[0].mxu0
  %v241 = vadd.f32 %v60, %v240
  %v242 = vpop.f32.mrb[0].mxu0
  %243 = vmatprep.mubr.f32.mxu0 0.0
  %244 = vmatmul.mubr.f32.gmra.mrb[0].mxu0 %v76
  %v245 = vpop.f32.mrb[0].mxu0
  %v246 = vadd.f32 %v60, %v245
  %v247 = vpop.f32.mrb[0].mxu0
  %248 = vmatprep.mubr.f32.mxu0 0.0
  %249 = vmatmul.mubr.f32.gmra.mrb[0].mxu0 %v79
  %v250 = vpop.f32.mrb[0].mxu0
  %v251 = vadd.f32 %v60, %v250
  %v252 = vpop.f32.mrb[0].mxu0
  %253 = vmatprep.mubr.f32.mxu0 0.0
  %254 = vmatmul.mubr.f32.gmra.mrb[0].mxu0 %v82
  %v255 = vpop.f32.mrb[0].mxu0
  %v256 = vadd.f32 %v60, %v255
  %v257 = vpop.f32.mrb[0].mxu0
  %258 = vmatprep.mubr.f32.mxu0 0.0
  %259 = vmatmul.mubr.f32.gmra.mrb[0].mxu0 %v85
  %v260 = vpop.f32.mrb[0].mxu0
  %v261 = vadd.f32 %v60, %v260
  %v262 = vpop.f32.mrb[0].mxu0
  %263 = vmatprep.mubr.f32.mxu0 0.0
  %264 = vmatmul.mubr.f32.gmra.mrb[0].mxu0 %v88
  %v265 = vpop.f32.mrb[0].mxu0
  %v266 = vadd.f32 %v60, %v265
  %v267 = vpop.f32.mrb[0].mxu0
  %268 = vmatprep.mubr.f32.mxu0 0.0
  %269 = vmatmul.mubr.f32.gmra.mrb[0].mxu0 %v91
  %v270 = vpop.f32.mrb[0].mxu0
  %v271 = vadd.f32 %v60, %v270
  %v272 = vpop.f32.mrb[0].mxu0
  %273 = vmatprep.mubr.f32.mxu0 0.0
  %274 = vmatmul.mubr.f32.gmra.mrb[0].mxu0 %v94
  %v275 = vpop.f32.mrb[0].mxu0
  %v276 = vadd.f32 %v60, %v275
  %v277 = vpop.f32.mrb[0].mxu0
  %278 = vmatprep.mubr.f32.mxu0 0.0
  %279 = vmatmul.mubr.f32.gmra.mrb[0].mxu0 %v97
  %v280 = vpop.f32.mrb[0].mxu0
  %v281 = vadd.f32 %v60, %v280
  %v282 = vpop.f32.mrb[0].mxu0
  %283 = vmatprep.mubr.f32.mxu0 0.0
  %284 = vmatmul.mubr.f32.gmra.mrb[0].mxu0 %v100
  %v285 = vpop.f32.mrb[0].mxu0
  %v286 = vadd.f32 %v60, %v285
  %v287 = vpop.f32.mrb[0].mxu0
  %288 = vmatprep.mubr.f32.mxu0 0.0
  %289 = vmatmul.mubr.f32.gmra.mrb[0].mxu0 %v103
  %v290 = vpop.f32.mrb[0].mxu0
  %v291 = vadd.f32 %v60, %v290
  %v292 = vpop.f32.mrb[0].mxu0
  %293 = vmatprep.mubr.f32.mxu0 0.0
  %294 = vmatmul.mubr.f32.gmra.mrb[0].mxu0 %v106
  %v295 = vpop.f32.mrb[0].mxu0
  %v296 = vadd.f32 %v60, %v295
  %v297 = vpop.f32.mrb[0].mxu0
  %298 = vmatprep.mubr.f32.mxu0 0.0
  %299 = vmatmul.mubr.f32.gmra.mrb[0].mxu0 %v109
  %v300 = vpop.f32.mrb[0].mxu0
  %v301 = vadd.f32 %v60, %v300
  %v302 = vpop.f32.mrb[0].mxu0
  %303 = vmatprep.mubr.f32.mxu0 0.0
  %304 = vmatmul.mubr.f32.gmra.mrb[0].mxu0 %v112
  %v305 = vpop.f32.mrb[0].mxu0
  %v306 = vadd.f32 %v60, %v305
  %v307 = vpop.f32.mrb[0].mxu0
  %308 = vmatprep.mubr.f32.mxu0 0.0
  %309 = vmatmul.mubr.f32.gmra.mrb[0].mxu0 %v115
  %v310 = vpop.f32.mrb[0].mxu0
  %v311 = vadd.f32 %v60, %v310
  %v312 = vpop.f32.mrb[0].mxu0
  %313 = vmatprep.mubr.f32.mxu0 0.0
  %314 = vmatmul.mubr.f32.gmra.mrb[0].mxu0 %v118
  %v315 = vpop.f32.mrb[0].mxu0
  %v316 = vadd.f32 %v60, %v315
  %v317 = vpop.f32.mrb[0].mxu0
  %318 = vmatprep.mubr.f32.mxu0 0.0
  %319 = vmatmul.mubr.f32.gmra.mrb[0].mxu0 %v121
  %v320 = vpop.f32.mrb[0].mxu0
  %v321 = vadd.f32 %v60, %v320
  %v322 = vpop.f32.mrb[0].mxu0
  %323 = vmatprep.mubr.f32.mxu0 0.0
  %324 = vmatmul.mubr.f32.gmra.mrb[0].mxu0 %v124
  %v325 = vpop.f32.mrb[0].mxu0
  %v326 = vadd.f32 %v60, %v325
  %v327 = vpop.f32.mrb[0].mxu0
  %328 = vmatprep.mubr.f32.mxu0 0.0
  %329 = vmatmul.mubr.f32.gmra.mrb[0].mxu0 %v127
  %v330 = vpop.f32.mrb[0].mxu0
  %v331 = vadd.f32 %v60, %v330
  %v332 = vpop.f32.mrb[0].mxu0
  %333 = vmatprep.mubr.f32.mxu0 0.0
  %334 = vmatmul.mubr.f32.gmra.mrb[0].mxu0 %v130
  %v335 = vpop.f32.mrb[0].mxu0
  %v336 = vadd.f32 %v60, %v335
  %v337 = vpop.f32.mrb[0].mxu0
  %338 = vmatprep.mubr.f32.mxu0 0.0
  %339 = vmatmul.mubr.f32.gmra.mrb[0].mxu0 %v133
  %v340 = vpop.f32.mrb[0].mxu0
  %v341 = vadd.f32 %v60, %v340
  %v342 = vpop.f32.mrb[0].mxu0
  %343 = vmatprep.mubr.f32.mxu0 0.0
  %344 = vmatmul.mubr.f32.gmra.mrb[0].mxu0 %v136
  %v345 = vpop.f32.mrb[0].mxu0
  %v346 = vadd.f32 %v60, %v345
  %v347 = vpop.f32.mrb[0].mxu0
  %348 = vmatprep.mubr.f32.mxu0 0.0
  %349 = vmatmul.mubr.f32.gmra.mrb[0].mxu0 %v139
  %v350 = vpop.f32.mrb[0].mxu0
  %v351 = vadd.f32 %v60, %v350
  %v352 = vpop.f32.mrb[0].mxu0
  %353 = vmatprep.mubr.f32.mxu0 0.0
  %354 = vmatmul.mubr.f32.gmra.mrb[0].mxu0 %v142
  %v355 = vpop.f32.mrb[0].mxu0
  %v356 = vadd.f32 %v60, %v355
  %v357 = vpop.f32.mrb[0].mxu0
  %358 = vmatprep.mubr.f32.mxu0 0.0
  %359 = vmatmul.mubr.f32.gmra.mrb[0].mxu0 %v145
  %v360 = vpop.f32.mrb[0].mxu0
  %v361 = vadd.f32 %v60, %v360
  %v362 = vpop.f32.mrb[0].mxu0
  %363 = vmatprep.mubr.f32.mxu0 0.0
  %364 = vmatmul.mubr.f32.gmra.mrb[0].mxu0 %v148
  %v365 = vpop.f32.mrb[0].mxu0
  %v366 = vadd.f32 %v60, %v365
  %v367 = vpop.f32.mrb[0].mxu0
  %368 = vmatprep.mubr.f32.mxu0 0.0
  %369 = vmatmul.mubr.f32.gmra.mrb[0].mxu0 %v151
  %v370 = vpop.f32.mrb[0].mxu0
  %v371 = vadd.f32 %v60, %v370
  %v372 = vpop.f32.mrb[0].mxu0
  %373 = vmatprep.mubr.f32.mxu0 0.0
  %374 = vmatmul.mubr.f32.gmra.mrb[0].mxu0 %v154
  %v375 = vpop.f32.mrb[0].mxu0
  %v376 = vadd.f32 %v60, %v375
  %v377 = vpop.f32.mrb[0].mxu0
  %378 = vmatprep.mubr.f32.mxu0 0.0
  %379 = vmatmul.mubr.f32.gmra.mrb[0].mxu0 %v157
  %v380 = vpop.f32.mrb[0].mxu0
  %v381 = vadd.f32 %v60, %v380
  %v382 = vpop.f32.mrb[0].mxu0
  %383 = vdwg.mxu0
  %v384 = vmax.f32 %v226, 0.0
  %v385 = vmax.f32 %v231, 0.0
  %v386 = vmax.f32 %v236, 0.0
  %v387 = vmax.f32 %v241, 0.0
  %v388 = vmax.f32 %v246, 0.0
  %v389 = vmax.f32 %v251, 0.0
  %v390 = vmax.f32 %v256, 0.0
  %v391 = vmax.f32 %v261, 0.0
  %v392 = vmax.f32 %v266, 0.0
  %v393 = vmax.f32 %v271, 0.0
  %v394 = vmax.f32 %v276, 0.0
  %v395 = vmax.f32 %v281, 0.0
  %v396 = vmax.f32 %v286, 0.0
  %v397 = vmax.f32 %v291, 0.0
  %v398 = vmax.f32 %v296, 0.0
  %v399 = vmax.f32 %v301, 0.0
  %v400 = vmax.f32 %v306, 0.0
  %v401 = vmax.f32 %v311, 0.0
  %v402 = vmax.f32 %v316, 0.0
  %v403 = vmax.f32 %v321, 0.0
  %v404 = vmax.f32 %v326, 0.0
  %v405 = vmax.f32 %v331, 0.0
  %v406 = vmax.f32 %v336, 0.0
  %v407 = vmax.f32 %v341, 0.0
  %v408 = vmax.f32 %v346, 0.0
  %v409 = vmax.f32 %v351, 0.0
  %v410 = vmax.f32 %v356, 0.0
  %v411 = vmax.f32 %v361, 0.0
  %v412 = vmax.f32 %v366, 0.0
  %v413 = vmax.f32 %v371, 0.0
  %v414 = vmax.f32 %v376, 0.0
  %v415 = vmax.f32 %v381, 0.0
  %v416 = vld [vmem:[%s3] sm:$0x1]
  %v418 = vlaneseq
  %v419 = vshrl.u32 %v418, 7
  %v420 = vsub.s32 0, %v419
  %v421 = vrot.slane %v416, %v420
  %v423 = vmul.f32 %v384, %v421
  %v424 = vmul.f32 %v385, %v421
  %v425 = vmul.f32 %v386, %v421
  %v426 = vmul.f32 %v387, %v421
  %v427 = vmul.f32 %v388, %v421
  %v428 = vmul.f32 %v389, %v421
  %v429 = vmul.f32 %v390, %v421
  %v430 = vmul.f32 %v391, %v421
  %v431 = vmul.f32 %v392, %v421
  %v432 = vmul.f32 %v393, %v421
  %v433 = vmul.f32 %v394, %v421
  %v434 = vmul.f32 %v395, %v421
  %v435 = vmul.f32 %v396, %v421
  %v436 = vmul.f32 %v397, %v421
  %v437 = vmul.f32 %v398, %v421
  %v438 = vmul.f32 %v399, %v421
  %v439 = vmul.f32 %v400, %v421
  %v440 = vmul.f32 %v401, %v421
  %v441 = vmul.f32 %v402, %v421
  %v442 = vmul.f32 %v403, %v421
  %v443 = vmul.f32 %v404, %v421
  %v444 = vmul.f32 %v405, %v421
  %v445 = vmul.f32 %v406, %v421
  %v446 = vmul.f32 %v407, %v421
  %v447 = vmul.f32 %v408, %v421
  %v448 = vmul.f32 %v409, %v421
  %v449 = vmul.f32 %v410, %v421
  %v450 = vmul.f32 %v411, %v421
  %v451 = vmul.f32 %v412, %v421
  %v452 = vmul.f32 %v413, %v421
  %v453 = vmul.f32 %v414, %v421
  %v454 = vmul.f32 %v415, %v421
  %vm455 = vcmask 261120
  %v456 = vsel %vm455, %v423, 0.0
  %457 = vadd.xlane.f32.xlu0 %v456
  %v458 = vpop.xlane.xlu0 %457
  %v459 = vsel %vm455, %v424, 0.0
  %460 = vadd.xlane.f32.xlu0 %v459
  %v461 = vpop.xlane.xlu0 %460
  %v462 = vsel %vm455, %v425, 0.0
  %463 = vadd.xlane.f32.xlu0 %v462
  %v464 = vpop.xlane.xlu0 %463
  %v465 = vsel %vm455, %v426, 0.0
  %466 = vadd.xlane.f32.xlu0 %v465
  %v467 = vpop.xlane.xlu0 %466
  %v468 = vsel %vm455, %v427, 0.0
  %469 = vadd.xlane.f32.xlu0 %v468
  %v470 = vpop.xlane.xlu0 %469
  %v471 = vsel %vm455, %v428, 0.0
  %472 = vadd.xlane.f32.xlu0 %v471
  %v473 = vpop.xlane.xlu0 %472
  %v474 = vsel %vm455, %v429, 0.0
  %475 = vadd.xlane.f32.xlu0 %v474
  %v476 = vpop.xlane.xlu0 %475
  %v477 = vsel %vm455, %v430, 0.0
  %478 = vadd.xlane.f32.xlu0 %v477
  %v479 = vpop.xlane.xlu0 %478
  %v480 = vsel %vm455, %v431, 0.0
  %481 = vadd.xlane.f32.xlu0 %v480
  %v482 = vpop.xlane.xlu0 %481
  %v483 = vsel %vm455, %v432, 0.0
  %484 = vadd.xlane.f32.xlu0 %v483
  %v485 = vpop.xlane.xlu0 %484
  %v486 = vsel %vm455, %v433, 0.0
  %487 = vadd.xlane.f32.xlu0 %v486
  %v488 = vpop.xlane.xlu0 %487
  %v489 = vsel %vm455, %v434, 0.0
  %490 = vadd.xlane.f32.xlu0 %v489
  %v491 = vpop.xlane.xlu0 %490
  %v492 = vsel %vm455, %v435, 0.0
  %493 = vadd.xlane.f32.xlu0 %v492
  %v494 = vpop.xlane.xlu0 %493
  %v495 = vsel %vm455, %v436, 0.0
  %496 = vadd.xlane.f32.xlu0 %v495
  %v497 = vpop.xlane.xlu0 %496
  %v498 = vsel %vm455, %v437, 0.0
  %499 = vadd.xlane.f32.xlu0 %v498
  %v500 = vpop.xlane.xlu0 %499
  %v501 = vsel %vm455, %v438, 0.0
  %502 = vadd.xlane.f32.xlu0 %v501
  %v503 = vpop.xlane.xlu0 %502
  %v504 = vsel %vm455, %v439, 0.0
  %505 = vadd.xlane.f32.xlu0 %v504
  %v506 = vpop.xlane.xlu0 %505
  %v507 = vsel %vm455, %v440, 0.0
  %508 = vadd.xlane.f32.xlu0 %v507
  %v509 = vpop.xlane.xlu0 %508
  %v510 = vsel %vm455, %v441, 0.0
  %511 = vadd.xlane.f32.xlu0 %v510
  %v512 = vpop.xlane.xlu0 %511
  %v513 = vsel %vm455, %v442, 0.0
  %514 = vadd.xlane.f32.xlu0 %v513
  %v515 = vpop.xlane.xlu0 %514
  %v516 = vsel %vm455, %v443, 0.0
  %517 = vadd.xlane.f32.xlu0 %v516
  %v518 = vpop.xlane.xlu0 %517
  %v519 = vsel %vm455, %v444, 0.0
  %520 = vadd.xlane.f32.xlu0 %v519
  %v521 = vpop.xlane.xlu0 %520
  %v522 = vsel %vm455, %v445, 0.0
  %523 = vadd.xlane.f32.xlu0 %v522
  %v524 = vpop.xlane.xlu0 %523
  %v525 = vsel %vm455, %v446, 0.0
  %526 = vadd.xlane.f32.xlu0 %v525
  %v527 = vpop.xlane.xlu0 %526
  %v528 = vsel %vm455, %v447, 0.0
  %529 = vadd.xlane.f32.xlu0 %v528
  %v530 = vpop.xlane.xlu0 %529
  %v531 = vsel %vm455, %v448, 0.0
  %532 = vadd.xlane.f32.xlu0 %v531
  %v533 = vpop.xlane.xlu0 %532
  %v534 = vsel %vm455, %v449, 0.0
  %535 = vadd.xlane.f32.xlu0 %v534
  %v536 = vpop.xlane.xlu0 %535
  %v537 = vsel %vm455, %v450, 0.0
  %538 = vadd.xlane.f32.xlu0 %v537
  %v539 = vpop.xlane.xlu0 %538
  %v540 = vsel %vm455, %v451, 0.0
  %541 = vadd.xlane.f32.xlu0 %v540
  %v542 = vpop.xlane.xlu0 %541
  %v543 = vsel %vm455, %v452, 0.0
  %544 = vadd.xlane.f32.xlu0 %v543
  %v545 = vpop.xlane.xlu0 %544
  %v546 = vsel %vm455, %v453, 0.0
  %547 = vadd.xlane.f32.xlu0 %v546
  %v548 = vpop.xlane.xlu0 %547
  %v549 = vsel %vm455, %v454, 0.0
  %550 = vadd.xlane.f32.xlu0 %v549
  %v551 = vpop.xlane.xlu0 %550
  %s552 = sld [smem:[#allocation2]]
  %v553 = vstv %s552
  %v554 = vadd.f32 %v458, %v553
  %v555 = vadd.f32 %v461, %v553
  %v556 = vadd.f32 %v464, %v553
  %v557 = vadd.f32 %v467, %v553
  %v558 = vadd.f32 %v470, %v553
  %v559 = vadd.f32 %v473, %v553
  %v560 = vadd.f32 %v476, %v553
  %v561 = vadd.f32 %v479, %v553
  %v562 = vadd.f32 %v482, %v553
  %v563 = vadd.f32 %v485, %v553
  %v564 = vadd.f32 %v488, %v553
  %v565 = vadd.f32 %v491, %v553
  %v566 = vadd.f32 %v494, %v553
  %v567 = vadd.f32 %v497, %v553
  %v568 = vadd.f32 %v500, %v553
  %v569 = vadd.f32 %v503, %v553
  %v570 = vadd.f32 %v506, %v553
  %v571 = vadd.f32 %v509, %v553
  %v572 = vadd.f32 %v512, %v553
  %v573 = vadd.f32 %v515, %v553
  %v574 = vadd.f32 %v518, %v553
  %v575 = vadd.f32 %v521, %v553
  %v576 = vadd.f32 %v524, %v553
  %v577 = vadd.f32 %v527, %v553
  %v578 = vadd.f32 %v530, %v553
  %v579 = vadd.f32 %v533, %v553
  %v580 = vadd.f32 %v536, %v553
  %v581 = vadd.f32 %v539, %v553
  %v582 = vadd.f32 %v542, %v553
  %v583 = vadd.f32 %v545, %v553
  %v584 = vadd.f32 %v548, %v553
  %v585 = vadd.f32 %v551, %v553
  %vm586 = vcmask 7168
  %587 = vst.msk [vmem:[%s5] sm:$0xff] %vm586, %v554
  %588 = vst.msk [vmem:[%s5 + $0x8] sm:$0xff] %vm586, %v555
  %589 = vst.msk [vmem:[%s5 + $0x10] sm:$0xff] %vm586, %v556
  %590 = vst.msk [vmem:[%s5 + $0x18] sm:$0xff] %vm586, %v557
  %591 = vst.msk [vmem:[%s5 + $0x20] sm:$0xff] %vm586, %v558
  %592 = vst.msk [vmem:[%s5 + $0x28] sm:$0xff] %vm586, %v559
  %593 = vst.msk [vmem:[%s5 + $0x30] sm:$0xff] %vm586, %v560
  %594 = vst.msk [vmem:[%s5 + $0x38] sm:$0xff] %vm586, %v561
  %595 = vst.msk [vmem:[%s5 + $0x40] sm:$0xff] %vm586, %v562
  %596 = vst.msk [vmem:[%s5 + $0x48] sm:$0xff] %vm586, %v563
  %597 = vst.msk [vmem:[%s5 + $0x50] sm:$0xff] %vm586, %v564
  %598 = vst.msk [vmem:[%s5 + $0x58] sm:$0xff] %vm586, %v565
  %599 = vst.msk [vmem:[%s5 + $0x60] sm:$0xff] %vm586, %v566
  %600 = vst.msk [vmem:[%s5 + $0x68] sm:$0xff] %vm586, %v567
  %601 = vst.msk [vmem:[%s5 + $0x70] sm:$0xff] %vm586, %v568
  %602 = vst.msk [vmem:[%s5 + $0x78] sm:$0xff] %vm586, %v569
  %603 = vst.msk [vmem:[%s5 + $0x80] sm:$0xff] %vm586, %v570
  %604 = vst.msk [vmem:[%s5 + $0x88] sm:$0xff] %vm586, %v571
  %605 = vst.msk [vmem:[%s5 + $0x90] sm:$0xff] %vm586, %v572
  %606 = vst.msk [vmem:[%s5 + $0x98] sm:$0xff] %vm586, %v573
  %607 = vst.msk [vmem:[%s5 + $0xa0] sm:$0xff] %vm586, %v574
  %608 = vst.msk [vmem:[%s5 + $0xa8] sm:$0xff] %vm586, %v575
  %609 = vst.msk [vmem:[%s5 + $0xb0] sm:$0xff] %vm586, %v576
  %610 = vst.msk [vmem:[%s5 + $0xb8] sm:$0xff] %vm586, %v577
  %611 = vst.msk [vmem:[%s5 + $0xc0] sm:$0xff] %vm586, %v578
  %612 = vst.msk [vmem:[%s5 + $0xc8] sm:$0xff] %vm586, %v579
  %613 = vst.msk [vmem:[%s5 + $0xd0] sm:$0xff] %vm586, %v580
  %614 = vst.msk [vmem:[%s5 + $0xd8] sm:$0xff] %vm586, %v581
  %615 = vst.msk [vmem:[%s5 + $0xe0] sm:$0xff] %vm586, %v582
  %616 = vst.msk [vmem:[%s5 + $0xe8] sm:$0xff] %vm586, %v583
  %617 = vst.msk [vmem:[%s5 + $0xf0] sm:$0xff] %vm586, %v584
  %618 = vst.msk [vmem:[%s5 + $0xf8] sm:$0xff] %vm586, %v585
  // Predicated region
  $region22: #{tpu_custom_call.1} parent=0 // pred_check
    _
  $region23: #{tpu_custom_call.1} parent=0 // pred_check_branch
    %620 = sbr.rel (0) target = $region25
  $region24: #{tpu_custom_call.1} parent=0 // pred_region
    _
  $region25: #{tpu_custom_call.1} parent=0 // pred_fallthru
    _
  // Predicated region
  $region26: #{tpu_custom_call.1} parent=0 // pred_check
    _
  $region27: #{tpu_custom_call.1} parent=0 // pred_check_branch
    %622 = sbr.rel (0) target = $region29
  $region28: #{tpu_custom_call.1} parent=0 // pred_region
    _
  $region29: #{tpu_custom_call.1} parent=0 // pred_fallthru
    _

// kernel: tpu_custom_call.1
$region0: #{tpu_custom_call.1}
  #allocation0 [shape = 'u32[]', space=smem, size = 0x4, offset = 0x4, fixed_abs, tag = 'smem constant byte address 0x4 - core index']
  #allocation1 [shape = 'u32[144,128]{1,0:T(1,128)}', space=vmem, size = 0x12000, scoped, tag = 'internal scratch']
  #allocation2 [shape = 'f32[1,1]{1,0:T(1,128)S(6)}', space=smem, size = 0x200, scoped, tag = 'scoped memory for tpu_custom_call.1']
  %s0 = inlined_call_operand.vmem [shape: f32[256,16], index: 0, kind: input, shape index: {}]
  %s1 = inlined_call_operand.vmem [shape: f32[16,32], index: 1, kind: input, shape index: {}]
  %s2 = inlined_call_operand.vmem [shape: f32[1,32], index: 2, kind: input, shape index: {}]
  %s3 = inlined_call_operand.vmem [shape: f32[1,32], index: 3, kind: input, shape index: {}]
  %s4 = inlined_call_operand.<no memory space> [shape: f32[1,1], index: 4, kind: input, shape index: {}]
  %s5 = inlined_call_operand.vmem [shape: f32[256,1], index: 5, kind: output, shape index: {}]
  %s6 = sld [smem:[#allocation0]]
  $region30: #{tpu_custom_call.1} parent=0
    _
  %s8 = ssub.s32 1, %s6
  %s9 = scalar_select 0, %s8, %s6
  %10 = sst [smem:[#allocation2]] %s4
  // Predicated region
  $region2: #{tpu_custom_call.1} parent=0 // pred_check
    _
  $region3: #{tpu_custom_call.1} parent=0 // pred_check_branch
    %12 = sbr.rel (0) target = $region5
  $region4: #{tpu_custom_call.1} parent=0 // pred_region
    _
  $region5: #{tpu_custom_call.1} parent=0 // pred_fallthru
    _
  // Predicated region
  $region6: #{tpu_custom_call.1} parent=0 // pred_check
    _
  $region7: #{tpu_custom_call.1} parent=0 // pred_check_branch
    %14 = sbr.rel (0) target = $region9
  $region8: #{tpu_custom_call.1} parent=0 // pred_region
    _
  $region9: #{tpu_custom_call.1} parent=0 // pred_fallthru
    _
  // Predicated region
  $region10: #{tpu_custom_call.1} parent=0 // pred_check
    _
  $region11: #{tpu_custom_call.1} parent=0 // pred_check_branch
    %16 = sbr.rel (0) target = $region13
  $region12: #{tpu_custom_call.1} parent=0 // pred_region
    _
  $region13: #{tpu_custom_call.1} parent=0 // pred_fallthru
    _
  // Predicated region
  $region14: #{tpu_custom_call.1} parent=0 // pred_check
    _
  $region15: #{tpu_custom_call.1} parent=0 // pred_check_branch
    %18 = sbr.rel (0) target = $region17
  $region16: #{tpu_custom_call.1} parent=0 // pred_region
    _
  $region17: #{tpu_custom_call.1} parent=0 // pred_fallthru
    _
  // Predicated region
  $region18: #{tpu_custom_call.1} parent=0 // pred_check
    _
  $region19: #{tpu_custom_call.1} parent=0 // pred_check_branch
    %20 = sbr.rel (0) target = $region21
  $region20: #{tpu_custom_call.1} parent=0 // pred_region
    _
  $region21: #{tpu_custom_call.1} parent=0 // pred_fallthru
    _
  %v21 = vld [vmem:[%s0] sm:$0xff]
  %v22 = vld [vmem:[%s0 + $0x8] sm:$0xff]
  %v23 = vld [vmem:[%s0 + $0x10] sm:$0xff]
  %v24 = vld [vmem:[%s0 + $0x18] sm:$0xff]
  %v25 = vld [vmem:[%s0 + $0x20] sm:$0xff]
  %v26 = vld [vmem:[%s0 + $0x28] sm:$0xff]
  %v27 = vld [vmem:[%s0 + $0x30] sm:$0xff]
  %v28 = vld [vmem:[%s0 + $0x38] sm:$0xff]
  %v29 = vld [vmem:[%s0 + $0x40] sm:$0xff]
  %v30 = vld [vmem:[%s0 + $0x48] sm:$0xff]
  %v31 = vld [vmem:[%s0 + $0x50] sm:$0xff]
  %v32 = vld [vmem:[%s0 + $0x58] sm:$0xff]
  %v33 = vld [vmem:[%s0 + $0x60] sm:$0xff]
  %v34 = vld [vmem:[%s0 + $0x68] sm:$0xff]
  %v35 = vld [vmem:[%s0 + $0x70] sm:$0xff]
  %v36 = vld [vmem:[%s0 + $0x78] sm:$0xff]
  %v37 = vld [vmem:[%s0 + $0x80] sm:$0xff]
  %v38 = vld [vmem:[%s0 + $0x88] sm:$0xff]
  %v39 = vld [vmem:[%s0 + $0x90] sm:$0xff]
  %v40 = vld [vmem:[%s0 + $0x98] sm:$0xff]
  %v41 = vld [vmem:[%s0 + $0xa0] sm:$0xff]
  %v42 = vld [vmem:[%s0 + $0xa8] sm:$0xff]
  %v43 = vld [vmem:[%s0 + $0xb0] sm:$0xff]
  %v44 = vld [vmem:[%s0 + $0xb8] sm:$0xff]
  %v45 = vld [vmem:[%s0 + $0xc0] sm:$0xff]
  %v46 = vld [vmem:[%s0 + $0xc8] sm:$0xff]
  %v47 = vld [vmem:[%s0 + $0xd0] sm:$0xff]
  %v48 = vld [vmem:[%s0 + $0xd8] sm:$0xff]
  %v49 = vld [vmem:[%s0 + $0xe0] sm:$0xff]
  %v50 = vld [vmem:[%s0 + $0xe8] sm:$0xff]
  %v51 = vld [vmem:[%s0 + $0xf0] sm:$0xff]
  %v52 = vld [vmem:[%s0 + $0xf8] sm:$0xff]
  %v53 = vld [vmem:[%s1] sm:$0xff]
  %v54 = vld [vmem:[%s1 + $0x8] sm:$0xff]
  %v55 = vld [vmem:[%s2] sm:$0x1]
  %v57 = vlaneseq
  %v58 = vshrl.u32 %v57, 7
  %v59 = vsub.s32 0, %v58
  %v60 = vrot.slane %v55, %v59
  %vm62 = vcmask 130048
  %v64 = vsel %vm62, %v21, 0
  %v67 = vsel %vm62, %v22, 0
  %v70 = vsel %vm62, %v23, 0
  %v73 = vsel %vm62, %v24, 0
  %v76 = vsel %vm62, %v25, 0
  %v79 = vsel %vm62, %v26, 0
  %v82 = vsel %vm62, %v27, 0
  %v85 = vsel %vm62, %v28, 0
  %v88 = vsel %vm62, %v29, 0
  %v91 = vsel %vm62, %v30, 0
  %v94 = vsel %vm62, %v31, 0
  %v97 = vsel %vm62, %v32, 0
  %v100 = vsel %vm62, %v33, 0
  %v103 = vsel %vm62, %v34, 0
  %v106 = vsel %vm62, %v35, 0
  %v109 = vsel %vm62, %v36, 0
  %v112 = vsel %vm62, %v37, 0
  %v115 = vsel %vm62, %v38, 0
  %v118 = vsel %vm62, %v39, 0
  %v121 = vsel %vm62, %v40, 0
  %v124 = vsel %vm62, %v41, 0
  %v127 = vsel %vm62, %v42, 0
  %v130 = vsel %vm62, %v43, 0
  %v133 = vsel %vm62, %v44, 0
  %v136 = vsel %vm62, %v45, 0
  %v139 = vsel %vm62, %v46, 0
  %v142 = vsel %vm62, %v47, 0
  %v145 = vsel %vm62, %v48, 0
  %v148 = vsel %vm62, %v49, 0
  %v151 = vsel %vm62, %v50, 0
  %v154 = vsel %vm62, %v51, 0
  %v157 = vsel %vm62, %v52, 0
  %159 = vmatprep.subr.mxu0 0.0
  %160 = vmatpush1.msra.mxu0 %v53
  %161 = vmatprep.subr.mxu0 0.0
  %162 = vmatpush1.msra.mxu0 %v54
  %163 = vmatprep.subr.mxu0 0.0
  %164 = vmatpush1.msra.mxu0 0.0
  %165 = vmatprep.subr.mxu0 0.0
  %166 = vmatpush1.msra.mxu0 0.0
  %167 = vmatprep.subr.mxu0 0.0
  %168 = vmatpush1.msra.mxu0 0.0
  %169 = vmatprep.subr.mxu0 0.0
  %170 = vmatpush1.msra.mxu0 0.0
  %171 = vmatprep.subr.mxu0 0.0
  %172 = vmatpush1.msra.mxu0 0.0
  %173 = vmatprep.subr.mxu0 0.0
  %174 = vmatpush1.msra.mxu0 0.0
  %175 = vmatprep.subr.mxu0 0.0
  %176 = vmatpush1.msra.mxu0 0.0
  %177 = vmatprep.subr.mxu0 0.0
  %178 = vmatpush1.msra.mxu0 0.0
  %179 = vmatprep.subr.mxu0 0.0
  %180 = vmatpush1.msra.mxu0 0.0
  %181 = vmatprep.subr.mxu0 0.0
  %182 = vmatpush1.msra.mxu0 0.0
  %183 = vmatprep.subr.mxu0 0.0
  %184 = vmatpush1.msra.mxu0 0.0
  %185 = vmatprep.subr.mxu0 0.0
  %186 = vmatpush1.msra.mxu0 0.0
  %187 = vmatprep.subr.mxu0 0.0
  %188 = vmatpush1.msra.mxu0 0.0
  %189 = vmatprep.subr.mxu0 0.0
  %190 = vmatpush1.msra.mxu0 0.0
  %191 = vmatprep.subr.mxu0 0.0
  %192 = vmatpush1.msra.mxu0 0.0
  %193 = vmatprep.subr.mxu0 0.0
  %194 = vmatpush1.msra.mxu0 0.0
  %195 = vmatprep.subr.mxu0 0.0
  %196 = vmatpush1.msra.mxu0 0.0
  %197 = vmatprep.subr.mxu0 0.0
  %198 = vmatpush1.msra.mxu0 0.0
  %199 = vmatprep.subr.mxu0 0.0
  %200 = vmatpush1.msra.mxu0 0.0
  %201 = vmatprep.subr.mxu0 0.0
  %202 = vmatpush1.msra.mxu0 0.0
  %203 = vmatprep.subr.mxu0 0.0
  %204 = vmatpush1.msra.mxu0 0.0
  %205 = vmatprep.subr.mxu0 0.0
  %206 = vmatpush1.msra.mxu0 0.0
  %207 = vmatprep.subr.mxu0 0.0
  %208 = vmatpush1.msra.mxu0 0.0
  %209 = vmatprep.subr.mxu0 0.0
  %210 = vmatpush1.msra.mxu0 0.0
  %211 = vmatprep.subr.mxu0 0.0
  %212 = vmatpush1.msra.mxu0 0.0
  %213 = vmatprep.subr.mxu0 0.0
  %214 = vmatpush1.msra.mxu0 0.0
  %215 = vmatprep.subr.mxu0 0.0
  %216 = vmatpush1.msra.mxu0 0.0
  %217 = vmatprep.subr.mxu0 0.0
  %218 = vmatpush1.msra.mxu0 0.0
  %219 = vmatprep.subr.mxu0 0.0
  %220 = vmatpush1.msra.mxu0 0.0
  %221 = vmatprep.subr.mxu0 0.0
  %222 = vmatpush1.msra.mxu0 0.0
  %223 = vmatprep.mubr.f32.mxu0 0.0
  %224 = vmatmul.mubr.f32.gmra.mrb[0].mxu0 %v64
  %v225 = vpop.f32.mrb[0].mxu0
  %v226 = vadd.f32 %v60, %v225
  %v227 = vpop.f32.mrb[0].mxu0
  %228 = vmatprep.mubr.f32.mxu0 0.0
  %229 = vmatmul.mubr.f32.gmra.mrb[0].mxu0 %v67
  %v230 = vpop.f32.mrb[0].mxu0
  %v231 = vadd.f32 %v60, %v230
  %v232 = vpop.f32.mrb[0].mxu0
  %233 = vmatprep.mubr.f32.mxu0 0.0
  %234 = vmatmul.mubr.f32.gmra.mrb[0].mxu0 %v70
  %v235 = vpop.f32.mrb[0].mxu0
  %v236 = vadd.f32 %v60, %v235
  %v237 = vpop.f32.mrb[0].mxu0
  %238 = vmatprep.mubr.f32.mxu0 0.0
  %239 = vmatmul.mubr.f32.gmra.mrb[0].mxu0 %v73
  %v240 = vpop.f32.mrb[0].mxu0
  %v241 = vadd.f32 %v60, %v240
  %v242 = vpop.f32.mrb[0].mxu0
  %243 = vmatprep.mubr.f32.mxu0 0.0
  %244 = vmatmul.mubr.f32.gmra.mrb[0].mxu0 %v76
  %v245 = vpop.f32.mrb[0].mxu0
  %v246 = vadd.f32 %v60, %v245
  %v247 = vpop.f32.mrb[0].mxu0
  %248 = vmatprep.mubr.f32.mxu0 0.0
  %249 = vmatmul.mubr.f32.gmra.mrb[0].mxu0 %v79
  %v250 = vpop.f32.mrb[0].mxu0
  %v251 = vadd.f32 %v60, %v250
  %v252 = vpop.f32.mrb[0].mxu0
  %253 = vmatprep.mubr.f32.mxu0 0.0
  %254 = vmatmul.mubr.f32.gmra.mrb[0].mxu0 %v82
  %v255 = vpop.f32.mrb[0].mxu0
  %v256 = vadd.f32 %v60, %v255
  %v257 = vpop.f32.mrb[0].mxu0
  %258 = vmatprep.mubr.f32.mxu0 0.0
  %259 = vmatmul.mubr.f32.gmra.mrb[0].mxu0 %v85
  %v260 = vpop.f32.mrb[0].mxu0
  %v261 = vadd.f32 %v60, %v260
  %v262 = vpop.f32.mrb[0].mxu0
  %263 = vmatprep.mubr.f32.mxu0 0.0
  %264 = vmatmul.mubr.f32.gmra.mrb[0].mxu0 %v88
  %v265 = vpop.f32.mrb[0].mxu0
  %v266 = vadd.f32 %v60, %v265
  %v267 = vpop.f32.mrb[0].mxu0
  %268 = vmatprep.mubr.f32.mxu0 0.0
  %269 = vmatmul.mubr.f32.gmra.mrb[0].mxu0 %v91
  %v270 = vpop.f32.mrb[0].mxu0
  %v271 = vadd.f32 %v60, %v270
  %v272 = vpop.f32.mrb[0].mxu0
  %273 = vmatprep.mubr.f32.mxu0 0.0
  %274 = vmatmul.mubr.f32.gmra.mrb[0].mxu0 %v94
  %v275 = vpop.f32.mrb[0].mxu0
  %v276 = vadd.f32 %v60, %v275
  %v277 = vpop.f32.mrb[0].mxu0
  %278 = vmatprep.mubr.f32.mxu0 0.0
  %279 = vmatmul.mubr.f32.gmra.mrb[0].mxu0 %v97
  %v280 = vpop.f32.mrb[0].mxu0
  %v281 = vadd.f32 %v60, %v280
  %v282 = vpop.f32.mrb[0].mxu0
  %283 = vmatprep.mubr.f32.mxu0 0.0
  %284 = vmatmul.mubr.f32.gmra.mrb[0].mxu0 %v100
  %v285 = vpop.f32.mrb[0].mxu0
  %v286 = vadd.f32 %v60, %v285
  %v287 = vpop.f32.mrb[0].mxu0
  %288 = vmatprep.mubr.f32.mxu0 0.0
  %289 = vmatmul.mubr.f32.gmra.mrb[0].mxu0 %v103
  %v290 = vpop.f32.mrb[0].mxu0
  %v291 = vadd.f32 %v60, %v290
  %v292 = vpop.f32.mrb[0].mxu0
  %293 = vmatprep.mubr.f32.mxu0 0.0
  %294 = vmatmul.mubr.f32.gmra.mrb[0].mxu0 %v106
  %v295 = vpop.f32.mrb[0].mxu0
  %v296 = vadd.f32 %v60, %v295
  %v297 = vpop.f32.mrb[0].mxu0
  %298 = vmatprep.mubr.f32.mxu0 0.0
  %299 = vmatmul.mubr.f32.gmra.mrb[0].mxu0 %v109
  %v300 = vpop.f32.mrb[0].mxu0
  %v301 = vadd.f32 %v60, %v300
  %v302 = vpop.f32.mrb[0].mxu0
  %303 = vmatprep.mubr.f32.mxu0 0.0
  %304 = vmatmul.mubr.f32.gmra.mrb[0].mxu0 %v112
  %v305 = vpop.f32.mrb[0].mxu0
  %v306 = vadd.f32 %v60, %v305
  %v307 = vpop.f32.mrb[0].mxu0
  %308 = vmatprep.mubr.f32.mxu0 0.0
  %309 = vmatmul.mubr.f32.gmra.mrb[0].mxu0 %v115
  %v310 = vpop.f32.mrb[0].mxu0
  %v311 = vadd.f32 %v60, %v310
  %v312 = vpop.f32.mrb[0].mxu0
  %313 = vmatprep.mubr.f32.mxu0 0.0
  %314 = vmatmul.mubr.f32.gmra.mrb[0].mxu0 %v118
  %v315 = vpop.f32.mrb[0].mxu0
  %v316 = vadd.f32 %v60, %v315
  %v317 = vpop.f32.mrb[0].mxu0
  %318 = vmatprep.mubr.f32.mxu0 0.0
  %319 = vmatmul.mubr.f32.gmra.mrb[0].mxu0 %v121
  %v320 = vpop.f32.mrb[0].mxu0
  %v321 = vadd.f32 %v60, %v320
  %v322 = vpop.f32.mrb[0].mxu0
  %323 = vmatprep.mubr.f32.mxu0 0.0
  %324 = vmatmul.mubr.f32.gmra.mrb[0].mxu0 %v124
  %v325 = vpop.f32.mrb[0].mxu0
  %v326 = vadd.f32 %v60, %v325
  %v327 = vpop.f32.mrb[0].mxu0
  %328 = vmatprep.mubr.f32.mxu0 0.0
  %329 = vmatmul.mubr.f32.gmra.mrb[0].mxu0 %v127
  %v330 = vpop.f32.mrb[0].mxu0
  %v331 = vadd.f32 %v60, %v330
  %v332 = vpop.f32.mrb[0].mxu0
  %333 = vmatprep.mubr.f32.mxu0 0.0
  %334 = vmatmul.mubr.f32.gmra.mrb[0].mxu0 %v130
  %v335 = vpop.f32.mrb[0].mxu0
  %v336 = vadd.f32 %v60, %v335
  %v337 = vpop.f32.mrb[0].mxu0
  %338 = vmatprep.mubr.f32.mxu0 0.0
  %339 = vmatmul.mubr.f32.gmra.mrb[0].mxu0 %v133
  %v340 = vpop.f32.mrb[0].mxu0
  %v341 = vadd.f32 %v60, %v340
  %v342 = vpop.f32.mrb[0].mxu0
  %343 = vmatprep.mubr.f32.mxu0 0.0
  %344 = vmatmul.mubr.f32.gmra.mrb[0].mxu0 %v136
  %v345 = vpop.f32.mrb[0].mxu0
  %v346 = vadd.f32 %v60, %v345
  %v347 = vpop.f32.mrb[0].mxu0
  %348 = vmatprep.mubr.f32.mxu0 0.0
  %349 = vmatmul.mubr.f32.gmra.mrb[0].mxu0 %v139
  %v350 = vpop.f32.mrb[0].mxu0
  %v351 = vadd.f32 %v60, %v350
  %v352 = vpop.f32.mrb[0].mxu0
  %353 = vmatprep.mubr.f32.mxu0 0.0
  %354 = vmatmul.mubr.f32.gmra.mrb[0].mxu0 %v142
  %v355 = vpop.f32.mrb[0].mxu0
  %v356 = vadd.f32 %v60, %v355
  %v357 = vpop.f32.mrb[0].mxu0
  %358 = vmatprep.mubr.f32.mxu0 0.0
  %359 = vmatmul.mubr.f32.gmra.mrb[0].mxu0 %v145
  %v360 = vpop.f32.mrb[0].mxu0
  %v361 = vadd.f32 %v60, %v360
  %v362 = vpop.f32.mrb[0].mxu0
  %363 = vmatprep.mubr.f32.mxu0 0.0
  %364 = vmatmul.mubr.f32.gmra.mrb[0].mxu0 %v148
  %v365 = vpop.f32.mrb[0].mxu0
  %v366 = vadd.f32 %v60, %v365
  %v367 = vpop.f32.mrb[0].mxu0
  %368 = vmatprep.mubr.f32.mxu0 0.0
  %369 = vmatmul.mubr.f32.gmra.mrb[0].mxu0 %v151
  %v370 = vpop.f32.mrb[0].mxu0
  %v371 = vadd.f32 %v60, %v370
  %v372 = vpop.f32.mrb[0].mxu0
  %373 = vmatprep.mubr.f32.mxu0 0.0
  %374 = vmatmul.mubr.f32.gmra.mrb[0].mxu0 %v154
  %v375 = vpop.f32.mrb[0].mxu0
  %v376 = vadd.f32 %v60, %v375
  %v377 = vpop.f32.mrb[0].mxu0
  %378 = vmatprep.mubr.f32.mxu0 0.0
  %379 = vmatmul.mubr.f32.gmra.mrb[0].mxu0 %v157
  %v380 = vpop.f32.mrb[0].mxu0
  %v381 = vadd.f32 %v60, %v380
  %v382 = vpop.f32.mrb[0].mxu0
  %383 = vdwg.mxu0
  %v384 = vmax.f32 %v226, 0.0
  %v385 = vmax.f32 %v231, 0.0
  %v386 = vmax.f32 %v236, 0.0
  %v387 = vmax.f32 %v241, 0.0
  %v388 = vmax.f32 %v246, 0.0
  %v389 = vmax.f32 %v251, 0.0
  %v390 = vmax.f32 %v256, 0.0
  %v391 = vmax.f32 %v261, 0.0
  %v392 = vmax.f32 %v266, 0.0
  %v393 = vmax.f32 %v271, 0.0
  %v394 = vmax.f32 %v276, 0.0
  %v395 = vmax.f32 %v281, 0.0
  %v396 = vmax.f32 %v286, 0.0
  %v397 = vmax.f32 %v291, 0.0
  %v398 = vmax.f32 %v296, 0.0
  %v399 = vmax.f32 %v301, 0.0
  %v400 = vmax.f32 %v306, 0.0
  %v401 = vmax.f32 %v311, 0.0
  %v402 = vmax.f32 %v316, 0.0
  %v403 = vmax.f32 %v321, 0.0
  %v404 = vmax.f32 %v326, 0.0
  %v405 = vmax.f32 %v331, 0.0
  %v406 = vmax.f32 %v336, 0.0
  %v407 = vmax.f32 %v341, 0.0
  %v408 = vmax.f32 %v346, 0.0
  %v409 = vmax.f32 %v351, 0.0
  %v410 = vmax.f32 %v356, 0.0
  %v411 = vmax.f32 %v361, 0.0
  %v412 = vmax.f32 %v366, 0.0
  %v413 = vmax.f32 %v371, 0.0
  %v414 = vmax.f32 %v376, 0.0
  %v415 = vmax.f32 %v381, 0.0
  %v416 = vld [vmem:[%s3] sm:$0x1]
  %v418 = vlaneseq
  %v419 = vshrl.u32 %v418, 7
  %v420 = vsub.s32 0, %v419
  %v421 = vrot.slane %v416, %v420
  %v423 = vmul.f32 %v384, %v421
  %v424 = vmul.f32 %v385, %v421
  %v425 = vmul.f32 %v386, %v421
  %v426 = vmul.f32 %v387, %v421
  %v427 = vmul.f32 %v388, %v421
  %v428 = vmul.f32 %v389, %v421
  %v429 = vmul.f32 %v390, %v421
  %v430 = vmul.f32 %v391, %v421
  %v431 = vmul.f32 %v392, %v421
  %v432 = vmul.f32 %v393, %v421
  %v433 = vmul.f32 %v394, %v421
  %v434 = vmul.f32 %v395, %v421
  %v435 = vmul.f32 %v396, %v421
  %v436 = vmul.f32 %v397, %v421
  %v437 = vmul.f32 %v398, %v421
  %v438 = vmul.f32 %v399, %v421
  %v439 = vmul.f32 %v400, %v421
  %v440 = vmul.f32 %v401, %v421
  %v441 = vmul.f32 %v402, %v421
  %v442 = vmul.f32 %v403, %v421
  %v443 = vmul.f32 %v404, %v421
  %v444 = vmul.f32 %v405, %v421
  %v445 = vmul.f32 %v406, %v421
  %v446 = vmul.f32 %v407, %v421
  %v447 = vmul.f32 %v408, %v421
  %v448 = vmul.f32 %v409, %v421
  %v449 = vmul.f32 %v410, %v421
  %v450 = vmul.f32 %v411, %v421
  %v451 = vmul.f32 %v412, %v421
  %v452 = vmul.f32 %v413, %v421
  %v453 = vmul.f32 %v414, %v421
  %v454 = vmul.f32 %v415, %v421
  %vm455 = vcmask 261120
  %v456 = vsel %vm455, %v423, 0.0
  %457 = vadd.xlane.f32.xlu0 %v456
  %v458 = vpop.xlane.xlu0 %457
  %v459 = vsel %vm455, %v424, 0.0
  %460 = vadd.xlane.f32.xlu0 %v459
  %v461 = vpop.xlane.xlu0 %460
  %v462 = vsel %vm455, %v425, 0.0
  %463 = vadd.xlane.f32.xlu0 %v462
  %v464 = vpop.xlane.xlu0 %463
  %v465 = vsel %vm455, %v426, 0.0
  %466 = vadd.xlane.f32.xlu0 %v465
  %v467 = vpop.xlane.xlu0 %466
  %v468 = vsel %vm455, %v427, 0.0
  %469 = vadd.xlane.f32.xlu0 %v468
  %v470 = vpop.xlane.xlu0 %469
  %v471 = vsel %vm455, %v428, 0.0
  %472 = vadd.xlane.f32.xlu0 %v471
  %v473 = vpop.xlane.xlu0 %472
  %v474 = vsel %vm455, %v429, 0.0
  %475 = vadd.xlane.f32.xlu0 %v474
  %v476 = vpop.xlane.xlu0 %475
  %v477 = vsel %vm455, %v430, 0.0
  %478 = vadd.xlane.f32.xlu0 %v477
  %v479 = vpop.xlane.xlu0 %478
  %v480 = vsel %vm455, %v431, 0.0
  %481 = vadd.xlane.f32.xlu0 %v480
  %v482 = vpop.xlane.xlu0 %481
  %v483 = vsel %vm455, %v432, 0.0
  %484 = vadd.xlane.f32.xlu0 %v483
  %v485 = vpop.xlane.xlu0 %484
  %v486 = vsel %vm455, %v433, 0.0
  %487 = vadd.xlane.f32.xlu0 %v486
  %v488 = vpop.xlane.xlu0 %487
  %v489 = vsel %vm455, %v434, 0.0
  %490 = vadd.xlane.f32.xlu0 %v489
  %v491 = vpop.xlane.xlu0 %490
  %v492 = vsel %vm455, %v435, 0.0
  %493 = vadd.xlane.f32.xlu0 %v492
  %v494 = vpop.xlane.xlu0 %493
  %v495 = vsel %vm455, %v436, 0.0
  %496 = vadd.xlane.f32.xlu0 %v495
  %v497 = vpop.xlane.xlu0 %496
  %v498 = vsel %vm455, %v437, 0.0
  %499 = vadd.xlane.f32.xlu0 %v498
  %v500 = vpop.xlane.xlu0 %499
  %v501 = vsel %vm455, %v438, 0.0
  %502 = vadd.xlane.f32.xlu0 %v501
  %v503 = vpop.xlane.xlu0 %502
  %v504 = vsel %vm455, %v439, 0.0
  %505 = vadd.xlane.f32.xlu0 %v504
  %v506 = vpop.xlane.xlu0 %505
  %v507 = vsel %vm455, %v440, 0.0
  %508 = vadd.xlane.f32.xlu0 %v507
  %v509 = vpop.xlane.xlu0 %508
  %v510 = vsel %vm455, %v441, 0.0
  %511 = vadd.xlane.f32.xlu0 %v510
  %v512 = vpop.xlane.xlu0 %511
  %v513 = vsel %vm455, %v442, 0.0
  %514 = vadd.xlane.f32.xlu0 %v513
  %v515 = vpop.xlane.xlu0 %514
  %v516 = vsel %vm455, %v443, 0.0
  %517 = vadd.xlane.f32.xlu0 %v516
  %v518 = vpop.xlane.xlu0 %517
  %v519 = vsel %vm455, %v444, 0.0
  %520 = vadd.xlane.f32.xlu0 %v519
  %v521 = vpop.xlane.xlu0 %520
  %v522 = vsel %vm455, %v445, 0.0
  %523 = vadd.xlane.f32.xlu0 %v522
  %v524 = vpop.xlane.xlu0 %523
  %v525 = vsel %vm455, %v446, 0.0
  %526 = vadd.xlane.f32.xlu0 %v525
  %v527 = vpop.xlane.xlu0 %526
  %v528 = vsel %vm455, %v447, 0.0
  %529 = vadd.xlane.f32.xlu0 %v528
  %v530 = vpop.xlane.xlu0 %529
  %v531 = vsel %vm455, %v448, 0.0
  %532 = vadd.xlane.f32.xlu0 %v531
  %v533 = vpop.xlane.xlu0 %532
  %v534 = vsel %vm455, %v449, 0.0
  %535 = vadd.xlane.f32.xlu0 %v534
  %v536 = vpop.xlane.xlu0 %535
  %v537 = vsel %vm455, %v450, 0.0
  %538 = vadd.xlane.f32.xlu0 %v537
  %v539 = vpop.xlane.xlu0 %538
  %v540 = vsel %vm455, %v451, 0.0
  %541 = vadd.xlane.f32.xlu0 %v540
  %v542 = vpop.xlane.xlu0 %541
  %v543 = vsel %vm455, %v452, 0.0
  %544 = vadd.xlane.f32.xlu0 %v543
  %v545 = vpop.xlane.xlu0 %544
  %v546 = vsel %vm455, %v453, 0.0
  %547 = vadd.xlane.f32.xlu0 %v546
  %v548 = vpop.xlane.xlu0 %547
  %v549 = vsel %vm455, %v454, 0.0
  %550 = vadd.xlane.f32.xlu0 %v549
  %v551 = vpop.xlane.xlu0 %550
  %s552 = sld [smem:[#allocation2]]
  %v553 = vstv %s552
  %v554 = vadd.f32 %v458, %v553
  %v555 = vadd.f32 %v461, %v553
  %v556 = vadd.f32 %v464, %v553
  %v557 = vadd.f32 %v467, %v553
  %v558 = vadd.f32 %v470, %v553
  %v559 = vadd.f32 %v473, %v553
  %v560 = vadd.f32 %v476, %v553
  %v561 = vadd.f32 %v479, %v553
  %v562 = vadd.f32 %v482, %v553
  %v563 = vadd.f32 %v485, %v553
  %v564 = vadd.f32 %v488, %v553
  %v565 = vadd.f32 %v491, %v553
  %v566 = vadd.f32 %v494, %v553
  %v567 = vadd.f32 %v497, %v553
  %v568 = vadd.f32 %v500, %v553
  %v569 = vadd.f32 %v503, %v553
  %v570 = vadd.f32 %v506, %v553
  %v571 = vadd.f32 %v509, %v553
  %v572 = vadd.f32 %v512, %v553
  %v573 = vadd.f32 %v515, %v553
  %v574 = vadd.f32 %v518, %v553
  %v575 = vadd.f32 %v521, %v553
  %v576 = vadd.f32 %v524, %v553
  %v577 = vadd.f32 %v527, %v553
  %v578 = vadd.f32 %v530, %v553
  %v579 = vadd.f32 %v533, %v553
  %v580 = vadd.f32 %v536, %v553
  %v581 = vadd.f32 %v539, %v553
  %v582 = vadd.f32 %v542, %v553
  %v583 = vadd.f32 %v545, %v553
  %v584 = vadd.f32 %v548, %v553
  %v585 = vadd.f32 %v551, %v553
  %vm586 = vcmask 7168
  %587 = vst.msk [vmem:[%s5] sm:$0xff] %vm586, %v554
  %588 = vst.msk [vmem:[%s5 + $0x8] sm:$0xff] %vm586, %v555
  %589 = vst.msk [vmem:[%s5 + $0x10] sm:$0xff] %vm586, %v556
  %590 = vst.msk [vmem:[%s5 + $0x18] sm:$0xff] %vm586, %v557
  %591 = vst.msk [vmem:[%s5 + $0x20] sm:$0xff] %vm586, %v558
  %592 = vst.msk [vmem:[%s5 + $0x28] sm:$0xff] %vm586, %v559
  %593 = vst.msk [vmem:[%s5 + $0x30] sm:$0xff] %vm586, %v560
  %594 = vst.msk [vmem:[%s5 + $0x38] sm:$0xff] %vm586, %v561
  %595 = vst.msk [vmem:[%s5 + $0x40] sm:$0xff] %vm586, %v562
  %596 = vst.msk [vmem:[%s5 + $0x48] sm:$0xff] %vm586, %v563
  %597 = vst.msk [vmem:[%s5 + $0x50] sm:$0xff] %vm586, %v564
  %598 = vst.msk [vmem:[%s5 + $0x58] sm:$0xff] %vm586, %v565
  %599 = vst.msk [vmem:[%s5 + $0x60] sm:$0xff] %vm586, %v566
  %600 = vst.msk [vmem:[%s5 + $0x68] sm:$0xff] %vm586, %v567
  %601 = vst.msk [vmem:[%s5 + $0x70] sm:$0xff] %vm586, %v568
  %602 = vst.msk [vmem:[%s5 + $0x78] sm:$0xff] %vm586, %v569
  %603 = vst.msk [vmem:[%s5 + $0x80] sm:$0xff] %vm586, %v570
  %604 = vst.msk [vmem:[%s5 + $0x88] sm:$0xff] %vm586, %v571
  %605 = vst.msk [vmem:[%s5 + $0x90] sm:$0xff] %vm586, %v572
  %606 = vst.msk [vmem:[%s5 + $0x98] sm:$0xff] %vm586, %v573
  %607 = vst.msk [vmem:[%s5 + $0xa0] sm:$0xff] %vm586, %v574
  %608 = vst.msk [vmem:[%s5 + $0xa8] sm:$0xff] %vm586, %v575
  %609 = vst.msk [vmem:[%s5 + $0xb0] sm:$0xff] %vm586, %v576
  %610 = vst.msk [vmem:[%s5 + $0xb8] sm:$0xff] %vm586, %v577
  %611 = vst.msk [vmem:[%s5 + $0xc0] sm:$0xff] %vm586, %v578
  %612 = vst.msk [vmem:[%s5 + $0xc8] sm:$0xff] %vm586, %v579
  %613 = vst.msk [vmem:[%s5 + $0xd0] sm:$0xff] %vm586, %v580
  %614 = vst.msk [vmem:[%s5 + $0xd8] sm:$0xff] %vm586, %v581
  %615 = vst.msk [vmem:[%s5 + $0xe0] sm:$0xff] %vm586, %v582
  %616 = vst.msk [vmem:[%s5 + $0xe8] sm:$0xff] %vm586, %v583
  %617 = vst.msk [vmem:[%s5 + $0xf0] sm:$0xff] %vm586, %v584
  %618 = vst.msk [vmem:[%s5 + $0xf8] sm:$0xff] %vm586, %v585
  // Predicated region
  $region22: #{tpu_custom_call.1} parent=0 // pred_check
    _
  $region23: #{tpu_custom_call.1} parent=0 // pred_check_branch
    %620 = sbr.rel (0) target = $region25
  $region24: #{tpu_custom_call.1} parent=0 // pred_region
    _
  $region25: #{tpu_custom_call.1} parent=0 // pred_fallthru
    _
  // Predicated region
  $region26: #{tpu_custom_call.1} parent=0 // pred_check
    _
  $region27: #{tpu_custom_call.1} parent=0 // pred_check_branch
    %622 = sbr.rel (0) target = $region29
  $region28: #{tpu_custom_call.1} parent=0 // pred_region
    _
  $region29: #{tpu_custom_call.1} parent=0 // pred_fallthru
    _

</llo_original>
